<compile_context>
chip_gen: v7x
topology: tpu7x:2x2x1
jax: 0.10.0
libtpu: 0.0.40
codegen_flags: <defaults>
</compile_context>

<pallas_src>
import functools
import math

import jax
import jax.numpy as jnp
import numpy as np
from jax import lax
from jax.experimental import pallas as pl
from jax.experimental.pallas import tpu as pltpu

_LANE = 128
_SUBLANE = 8
_BIG_DIST = 1e30  # distance assigned to padded (fake) codebook rows


def rvq_kernel(x_ref, cb_ref, cbsq_ref, idx_ref, probs_ref, quant_ref, loss_ref,
               *, beta, d_true):
    residual = x_ref[...].astype(jnp.float32)            # [TN, Dp]
    quantized = jnp.zeros_like(residual)                  # [TN, Dp]
    L, K_pad, _ = cb_ref.shape
    tn = residual.shape[0]

    # Hoisted: level-invariant lane iota (JAX does not CSE broadcast_in_dim).
    lane_iota = lax.broadcasted_iota(jnp.int32, (tn, K_pad), 1)      # [TN, Kp]

    # TODO(synk): for large L (>~8) or very large K, switch this static unroll to
    # lax.fori_loop with dynamic cb_ref[l] indexing / K-blocking to bound vreg
    # pressure; at L=3 and small K the unroll is fine.
    for l in range(L):
        cb = cb_ref[l].astype(jnp.float32)                # [Kp, Dp]   per-level load
        cb_sq = cbsq_ref[l]                               # [Kp]       padded rows = BIG

        # -2 r C_l^T + ||C_l||^2  (row-constant ||r||^2 dropped on purpose)
        dots = lax.dot_general(residual, cb,
                               (((1,), (1,)), ((), ())),
                               preferred_element_type=jnp.float32)   # [TN, Kp] MXU
        dists = cb_sq[None, :] - 2.0 * dots                          # [TN, Kp]

        # argmin with first-occurrence tie-breaking (matches torch.argmin)
        min_d = jnp.min(dists, axis=-1, keepdims=True)               # [TN, 1]
        idx = jnp.min(jnp.where(dists == min_d, lane_iota, K_pad), axis=-1)
        idx = idx.astype(jnp.int32)                                  # [TN]

        # softmax(-d') reusing min_d as the stabilizer (max(-d') == -min_d):
        # one fewer XLU lane-reduce per level vs jax.nn.softmax.
        p = jnp.exp(min_d - dists)                                   # [TN, Kp] (EUP)
        denom = jnp.sum(p, axis=-1, keepdims=True)                   # [TN, 1]
        probs = p * pl.reciprocal(denom)   # approx=True possible if tolerance allows

        # exact codebook-row gather on the MXU
        onehot = (lane_iota == idx[:, None]).astype(jnp.float32)     # [TN, Kp]
        quants = jnp.dot(onehot, cb,
                         preferred_element_type=jnp.float32)         # [TN, Dp]

        # loss = (1+beta) * mean_D ||q - r||^2, rebuilt from min_d + ||r||^2
        # (padded D columns of residual are exactly zero, so the reduce is exact).
        r_sq = jnp.sum(residual * residual, axis=-1)                 # [TN]
        loss = (1.0 + beta) / d_true * (min_d[:, 0] + r_sq)          # [TN]

        # per-level, lane-dense output writes (minor axis = tn / K_pad)
        idx_ref[l, :] = idx
        probs_ref[l, :, :] = probs.astype(probs_ref.dtype)
        loss_ref[l, :] = loss

        residual = residual - quants
        quantized = quantized + quants

    quant_ref[...] = quantized.astype(quant_ref.dtype)               # [TN, Dp]


def _round_up(a, b):
    return (a + b - 1) // b * b


def _choose_token_tile(n_tokens, tile_n, per_tok_bytes, resident_bytes, budget_bytes):
    """Pick (token_tile, padded_token_count) under a VMEM budget."""
    n8 = _round_up(max(n_tokens, 1), _SUBLANE)
    if n8 < 2 * _LANE:
        # Tiny input: single grid step; the lane dim of the [L, n] outputs then
        # equals the full (padded) array extent, satisfying the (8,128) rule.
        return n8, n8
    tn_cap = max(_LANE,
                 ((budget_bytes - resident_bytes) // max(per_tok_bytes, 1))
                 // _LANE * _LANE)
    tn = min(_round_up(tile_n, _LANE), tn_cap, _round_up(n8, _LANE))
    n_pad = _round_up(n8, tn)
    # Guarantee >= 2 grid steps when the token count allows it (v7x: 2 TensorCores;
    # harmless elsewhere — better pipelining overlap).
    if n_pad // tn < 2 and tn > _LANE:
        tn = max(_LANE, (n8 // 2) // _LANE * _LANE)
        n_pad = _round_up(n8, tn)
    return tn, n_pad


def residual_vq_forward(x, codebooks, *, beta=0.01, tile_n=512,
                        probs_dtype=jnp.float32,
                        vmem_budget_bytes=24 * 1024 * 1024):
    """x: [B, T, D] or [B, D]; codebooks: [L, K, D] (module.get_codebooks layout)."""
    lead = x.shape[:-1]
    D = x.shape[-1]
    N = int(math.prod(lead)) if lead else 1
    L, K, Dc = codebooks.shape
    assert Dc == D

    # --- lane-density padding ---------------------------------------------------
    # Pad K and D up to multiples of 128 so distance/probs/onehot and the quant
    # tiles are lane-dense and stores are unmasked. Padded codebook rows are given
    # a huge ||C||^2 (never win argmin, ~0 softmax mass); padded D columns are zero
    # everywhere, so dots, ||r||^2 and quantized rows are unchanged.
    # NOTE: for tiny K this inflates the [L, N, K] probs HBM write — set
    # probs_dtype=jnp.bfloat16 to win those bytes back if downstream permits.
    K_pad = _round_up(K, _LANE)
    D_pad = _round_up(D, _LANE)

    cb = codebooks.astype(jnp.float32)
    cb_sq = jnp.sum(cb * cb, axis=-1)                      # [L, K] true ||C_l||^2
    if D_pad != D:
        cb = jnp.pad(cb, ((0, 0), (0, 0), (0, D_pad - D)))
    if K_pad != K:
        cb = jnp.pad(cb, ((0, 0), (0, K_pad - K), (0, 0)))
        cb_sq = jnp.pad(cb_sq, ((0, 0), (0, K_pad - K)), constant_values=_BIG_DIST)

    xf = x.reshape(N, D)
    if D_pad != D:
        xf = jnp.pad(xf, ((0, 0), (0, D_pad - D)))

    # --- token tiling / VMEM budget ----------------------------------------------
    x_bytes = jnp.dtype(x.dtype).itemsize
    p_bytes = jnp.dtype(probs_dtype).itemsize
    per_tok = 2 * (D_pad * x_bytes            # x tile (double-buffered)
                   + D_pad * x_bytes          # quantized tile
                   + L * K_pad * p_bytes      # probs tile
                   + 2 * L * 4)               # idx + loss tiles
    resident = 2 * (L * K_pad * D_pad * 4 + L * K_pad * 4)   # codebooks (worst-case 2x)
    tn, n_pad = _choose_token_tile(N, tile_n, per_tok, resident, vmem_budget_bytes)
    if n_pad != N:
        xf = jnp.pad(xf, ((0, n_pad - N), (0, 0)))
    grid = (n_pad // tn,)

    vmem_limit = int(min(max(resident + tn * per_tok + (8 << 20), 32 << 20), 64 << 20))

    out_shapes = (
        jax.ShapeDtypeStruct((L, n_pad), jnp.int32),          # hard indices  [L, N]
        jax.ShapeDtypeStruct((L, n_pad, K_pad), probs_dtype),  # soft probs    [L, N, Kp]
        jax.ShapeDtypeStruct((n_pad, D_pad), x.dtype),         # quantized     [N, Dp]
        jax.ShapeDtypeStruct((L, n_pad), jnp.float32),         # per-level losses [L, N]
    )

    kernel = functools.partial(rvq_kernel, beta=beta, d_true=float(D))

    def call(single_buffer_codebook):
        def resident_spec(shape, imap):
            if single_buffer_codebook:
                # Grid-invariant inputs: never re-DMA'd; request a single buffer to
                # halve their resident VMEM (headroom for bigger token tiles).
                return pl.BlockSpec(shape, imap, pipeline_mode=pl.Buffered(1))
            return pl.BlockSpec(shape, imap)

        return pl.pallas_call(
            kernel,
            out_shape=out_shapes,
            grid_spec=pltpu.PrefetchScalarGridSpec(
                num_scalar_prefetch=0,
                grid=grid,
                in_specs=[
                    pl.BlockSpec((tn, D_pad), lambda i: (i, 0)),         # token tile
                    resident_spec((L, K_pad, D_pad), lambda i: (0, 0, 0)),  # codebooks
                    resident_spec((L, K_pad), lambda i: (0, 0)),            # ||C||^2
                ],
                out_specs=[
                    pl.BlockSpec((L, tn), lambda i: (0, i)),
                    pl.BlockSpec((L, tn, K_pad), lambda i: (0, i, 0)),
                    pl.BlockSpec((tn, D_pad), lambda i: (i, 0)),
                    pl.BlockSpec((L, tn), lambda i: (0, i)),
                ],
            ),
            compiler_params=pltpu.CompilerParams(
                dimension_semantics=("parallel",),
                vmem_limit_bytes=vmem_limit),
        )(xf, cb, cb_sq)

    try:
        idx_out, probs_out, quant_out, loss_out = call(True)
    except Exception:
        # pipeline_mode / Buffered(1) unsupported on this jax version: fall back to
        # default double-buffered (but never re-DMA'd) resident codebook blocks.
        idx_out, probs_out, quant_out, loss_out = call(False)

    # Torch-matching layout restored in the wrapper (layout plumbing, not compute).
    hard = jnp.transpose(idx_out, (1, 0))[:N].reshape(*lead, L)
    probs = jnp.transpose(probs_out, (1, 2, 0))[:N, :K].reshape(*lead, K, L)
    quant = quant_out[:N, :D].reshape(*lead, D)
    losses = jnp.transpose(loss_out, (1, 0))[:N].reshape(*lead, L)
    return hard, probs, quant, losses


def _reference(x, codebooks, beta=0.01):
    """Plain-JAX reference for correctness checking (mirrors the torch module)."""
    lead = x.shape[:-1]
    D = x.shape[-1]
    xf = x.reshape(-1, D).astype(jnp.float32)
    L, K, _ = codebooks.shape
    residual = xf
    quantized = jnp.zeros_like(xf)
    idxs, probs, losses = [], [], []
    for l in range(L):
        cb = codebooks[l].astype(jnp.float32)
        d = (jnp.sum(residual ** 2, -1, keepdims=True)
             - 2.0 * residual @ cb.T + jnp.sum(cb ** 2, -1)[None, :])
        idx = jnp.argmin(d, axis=-1).astype(jnp.int32)
        p = jax.nn.softmax(-d, axis=-1)
        q = cb[idx]
        losses.append((1.0 + beta) * jnp.mean((q - residual) ** 2, axis=-1))
        idxs.append(idx)
        probs.append(p)
        residual = residual - q
        quantized = quantized + q
    return (
        jnp.stack(idxs, -1).reshape(*lead, L),
        jnp.stack(probs, -1).reshape(*lead, K, L),
        quantized.reshape(*lead, D),
        jnp.stack(losses, -1).reshape(*lead, L),
    )


if __name__ == "__main__":
    key = jax.random.PRNGKey(0)
    beta = 0.01
    L, K, D = 3, 32, 32
    kx, kc, kx2 = jax.random.split(key, 3)
    # deterministic synthetic codebooks (module get_codebooks layout: [L, K, D])
    codebooks = 0.1 * jax.random.normal(kc, (L, K, D), dtype=jnp.float32)

    def check(x):
        hard, probs, quant, losses = residual_vq_forward(x, codebooks, beta=beta)
        jax.block_until_ready((hard, probs, quant, losses))
        r_hard, r_probs, r_quant, r_losses = _reference(x, codebooks, beta=beta)
        np.testing.assert_array_equal(np.asarray(hard), np.asarray(r_hard))
        np.testing.assert_allclose(np.asarray(probs), np.asarray(r_probs), atol=1e-5)
        np.testing.assert_allclose(np.asarray(quant), np.asarray(r_quant), atol=1e-5)
        np.testing.assert_allclose(np.asarray(losses), np.asarray(r_losses), atol=1e-5)
        lead = x.shape[:-1]
        assert hard.shape == (*lead, L)
        assert probs.shape == (*lead, K, L)
        assert quant.shape == (*lead, D)
        assert losses.shape == (*lead, L)

    # Small shape from the module docstring ([B, T, D]) -> single-step grid.
    check(jax.random.normal(kx, (2, 8, D), dtype=jnp.float32))
    # Larger token count -> exercises the multi-step (grid >= 2) pipelined path.
    check(jax.random.normal(kx2, (2, 256, D), dtype=jnp.float32))

    print("KERNEL_OK")
</pallas_src>

<mosaic_0001>
module attributes {stable_mosaic.version = 11 : i64} {
  func.func @rvq_kernel(%arg0: i32, %arg1: memref<16x128xf32, #tpu.memory_space<vmem>>, %arg2: memref<3x128x128xf32, #tpu.memory_space<vmem>>, %arg3: memref<3x128xf32, #tpu.memory_space<vmem>>, %arg4: memref<3x16xi32, #tpu.memory_space<vmem>>, %arg5: memref<3x16x128xf32, #tpu.memory_space<vmem>>, %arg6: memref<16x128xf32, #tpu.memory_space<vmem>>, %arg7: memref<3x16xf32, #tpu.memory_space<vmem>>) attributes {dimension_semantics = [#tpu.dimension_semantics<parallel>], iteration_bounds = array<i64: 1>, scalar_prefetch = 0 : i64, scratch_operands = 0 : i64, tpu.core_type = #tpu.core_type<tc>, window_params = [{transform_indices = @transform_0, window_bounds = array<i64: 16, 128>}, {pipeline_mode = #tpu.pipeline_mode<synchronous>, transform_indices = @transform_1, window_bounds = array<i64: 3, 128, 128>}, {pipeline_mode = #tpu.pipeline_mode<synchronous>, transform_indices = @transform_2, window_bounds = array<i64: 3, 128>}, {transform_indices = @transform_3, window_bounds = array<i64: 3, 16>}, {transform_indices = @transform_4, window_bounds = array<i64: 3, 16, 128>}, {transform_indices = @transform_5, window_bounds = array<i64: 16, 128>}, {transform_indices = @transform_6, window_bounds = array<i64: 3, 16>}]} {
    %c0 = arith.constant 0 : index
    %c0_0 = arith.constant 0 : index
    %0 = vector.load %arg1[%c0, %c0_0] : memref<16x128xf32, #tpu.memory_space<vmem>>, vector<16x128xf32>
    %cst = arith.constant 0.000000e+00 : f32
    %1 = vector.broadcast %cst : f32 to vector<16x128xf32>
    %2 = tpu.iota {dimensions = array<i32: 1>} : vector<16x128xi32>
    %c0_1 = arith.constant 0 : index
    %c0_2 = arith.constant 0 : index
    %c0_3 = arith.constant 0 : index
    %3 = vector.load %arg2[%c0_1, %c0_2, %c0_3] : memref<3x128x128xf32, #tpu.memory_space<vmem>>, vector<1x128x128xf32>
    %4 = vector.shape_cast %3 : vector<1x128x128xf32> to vector<128x128xf32>
    %c0_4 = arith.constant 0 : index
    %c0_5 = arith.constant 0 : index
    %5 = vector.load %arg3[%c0_4, %c0_5] : memref<3x128xf32, #tpu.memory_space<vmem>>, vector<1x128xf32>
    %6 = vector.shape_cast %5 : vector<1x128xf32> to vector<128xf32>
    %cst_6 = arith.constant dense<0.000000e+00> : vector<16x128xf32>
    %7 = tpu.matmul %0, %4, %cst_6 {dimension_numbers = #tpu.dot_dimension_numbers<[1], [1], [0], [0], [0, 0, 1, 0], [], []>} : vector<16x128xf32>, vector<128x128xf32>, vector<16x128xf32> -> vector<16x128xf32>
    %8 = vector.shape_cast %6 : vector<128xf32> to vector<1x128xf32>
    %cst_7 = arith.constant 2.000000e+00 : f32
    %9 = vector.broadcast %cst_7 : f32 to vector<16x128xf32>
    %10 = arith.mulf %9, %7 : vector<16x128xf32>
    %11 = vector.broadcast %8 : vector<1x128xf32> to vector<16x128xf32>
    %12 = arith.subf %11, %10 : vector<16x128xf32>
    %cst_8 = arith.constant dense<0x7F800000> : vector<16xf32>
    %13 = vector.multi_reduction <minimumf>, %12, %cst_8 [1] : vector<16x128xf32> to vector<16xf32>
    %14 = vector.shape_cast %13 : vector<16xf32> to vector<16x1xf32>
    %15 = vector.broadcast %14 : vector<16x1xf32> to vector<16x128xf32>
    %16 = arith.cmpf oeq, %12, %15 : vector<16x128xf32>
    %c128_i32 = arith.constant 128 : i32
    %17 = vector.broadcast %c128_i32 : i32 to vector<16x128xi32>
    %18 = arith.select %16, %2, %17 : vector<16x128xi1>, vector<16x128xi32>
    %cst_9 = arith.constant dense<2147483647> : vector<16xi32>
    %19 = vector.multi_reduction <minsi>, %18, %cst_9 [1] : vector<16x128xi32> to vector<16xi32>
    %20 = vector.broadcast %14 : vector<16x1xf32> to vector<16x128xf32>
    %21 = arith.subf %20, %12 : vector<16x128xf32>
    %22 = math.exp %21 : vector<16x128xf32>
    %cst_10 = arith.constant dense<0.000000e+00> : vector<16xf32>
    %23 = vector.multi_reduction <add>, %22, %cst_10 [1] : vector<16x128xf32> to vector<16xf32>
    %24 = vector.shape_cast %23 : vector<16xf32> to vector<16x1xf32>
    %25 = tpu.reciprocal %24 : vector<16x1xf32> -> vector<16x1xf32>
    %26 = vector.broadcast %25 : vector<16x1xf32> to vector<16x128xf32>
    %27 = arith.mulf %22, %26 : vector<16x128xf32>
    %28 = vector.shape_cast %19 : vector<16xi32> to vector<16x1xi32>
    %29 = vector.broadcast %28 : vector<16x1xi32> to vector<16x128xi32>
    %30 = arith.cmpi eq, %2, %29 : vector<16x128xi32>
    %31 = arith.extui %30 : vector<16x128xi1> to vector<16x128xi32>
    %32 = arith.sitofp %31 : vector<16x128xi32> to vector<16x128xf32>
    %cst_11 = arith.constant dense<0.000000e+00> : vector<16x128xf32>
    %33 = tpu.matmul %32, %4, %cst_11 {dimension_numbers = #tpu.dot_dimension_numbers<[1], [0], [0], [1], [0, 0, 1, 1], [], []>} : vector<16x128xf32>, vector<128x128xf32>, vector<16x128xf32> -> vector<16x128xf32>
    %34 = arith.mulf %0, %0 : vector<16x128xf32>
    %cst_12 = arith.constant dense<0.000000e+00> : vector<16xf32>
    %35 = vector.multi_reduction <add>, %34, %cst_12 [1] : vector<16x128xf32> to vector<16xf32>
    %36 = vector.shape_cast %14 : vector<16x1xf32> to vector<16xf32>
    %37 = arith.addf %36, %35 : vector<16xf32>
    %cst_13 = arith.constant 3.156250e-02 : f32
    %38 = vector.broadcast %cst_13 : f32 to vector<16xf32>
    %39 = arith.mulf %38, %37 : vector<16xf32>
    %c0_14 = arith.constant 0 : index
    %c0_15 = arith.constant 0 : index
    %40 = vector.load %arg4[%c0_14, %c0_15] : memref<3x16xi32, #tpu.memory_space<vmem>>, vector<1x16xi32>
    %41 = vector.shape_cast %40 : vector<1x16xi32> to vector<16xi32>
    %42 = vector.shape_cast %19 : vector<16xi32> to vector<1x16xi32>
    tpu.vector_store %arg4[%c0_14, %c0_15], %42 {strides = array<i32>} : memref<3x16xi32, #tpu.memory_space<vmem>>, vector<1x16xi32>,
    %c0_16 = arith.constant 0 : index
    %c0_17 = arith.constant 0 : index
    %c0_18 = arith.constant 0 : index
    %43 = vector.load %arg5[%c0_16, %c0_17, %c0_18] : memref<3x16x128xf32, #tpu.memory_space<vmem>>, vector<1x16x128xf32>
    %44 = vector.shape_cast %43 : vector<1x16x128xf32> to vector<16x128xf32>
    %45 = vector.shape_cast %27 : vector<16x128xf32> to vector<1x16x128xf32>
    tpu.vector_store %arg5[%c0_16, %c0_17, %c0_18], %45 {strides = array<i32>} : memref<3x16x128xf32, #tpu.memory_space<vmem>>, vector<1x16x128xf32>,
    %c0_19 = arith.constant 0 : index
    %c0_20 = arith.constant 0 : index
    %46 = vector.load %arg7[%c0_19, %c0_20] : memref<3x16xf32, #tpu.memory_space<vmem>>, vector<1x16xf32>
    %47 = vector.shape_cast %46 : vector<1x16xf32> to vector<16xf32>
    %48 = vector.shape_cast %39 : vector<16xf32> to vector<1x16xf32>
    tpu.vector_store %arg7[%c0_19, %c0_20], %48 {strides = array<i32>} : memref<3x16xf32, #tpu.memory_space<vmem>>, vector<1x16xf32>,
    %49 = arith.subf %0, %33 : vector<16x128xf32>
    %50 = arith.addf %1, %33 : vector<16x128xf32>
    %c1 = arith.constant 1 : index
    %c0_21 = arith.constant 0 : index
    %c0_22 = arith.constant 0 : index
    %51 = vector.load %arg2[%c1, %c0_21, %c0_22] : memref<3x128x128xf32, #tpu.memory_space<vmem>>, vector<1x128x128xf32>
    %52 = vector.shape_cast %51 : vector<1x128x128xf32> to vector<128x128xf32>
    %c1_23 = arith.constant 1 : index
    %c0_24 = arith.constant 0 : index
    %53 = vector.load %arg3[%c1_23, %c0_24] : memref<3x128xf32, #tpu.memory_space<vmem>>, vector<1x128xf32>
    %54 = vector.shape_cast %53 : vector<1x128xf32> to vector<128xf32>
    %cst_25 = arith.constant dense<0.000000e+00> : vector<16x128xf32>
    %55 = tpu.matmul %49, %52, %cst_25 {dimension_numbers = #tpu.dot_dimension_numbers<[1], [1], [0], [0], [0, 0, 1, 0], [], []>} : vector<16x128xf32>, vector<128x128xf32>, vector<16x128xf32> -> vector<16x128xf32>
    %56 = vector.shape_cast %54 : vector<128xf32> to vector<1x128xf32>
    %cst_26 = arith.constant 2.000000e+00 : f32
    %57 = vector.broadcast %cst_26 : f32 to vector<16x128xf32>
    %58 = arith.mulf %57, %55 : vector<16x128xf32>
    %59 = vector.broadcast %56 : vector<1x128xf32> to vector<16x128xf32>
    %60 = arith.subf %59, %58 : vector<16x128xf32>
    %cst_27 = arith.constant dense<0x7F800000> : vector<16xf32>
    %61 = vector.multi_reduction <minimumf>, %60, %cst_27 [1] : vector<16x128xf32> to vector<16xf32>
    %62 = vector.shape_cast %61 : vector<16xf32> to vector<16x1xf32>
    %63 = vector.broadcast %62 : vector<16x1xf32> to vector<16x128xf32>
    %64 = arith.cmpf oeq, %60, %63 : vector<16x128xf32>
    %c128_i32_28 = arith.constant 128 : i32
    %65 = vector.broadcast %c128_i32_28 : i32 to vector<16x128xi32>
    %66 = arith.select %64, %2, %65 : vector<16x128xi1>, vector<16x128xi32>
    %cst_29 = arith.constant dense<2147483647> : vector<16xi32>
    %67 = vector.multi_reduction <minsi>, %66, %cst_29 [1] : vector<16x128xi32> to vector<16xi32>
    %68 = vector.broadcast %62 : vector<16x1xf32> to vector<16x128xf32>
    %69 = arith.subf %68, %60 : vector<16x128xf32>
    %70 = math.exp %69 : vector<16x128xf32>
    %cst_30 = arith.constant dense<0.000000e+00> : vector<16xf32>
    %71 = vector.multi_reduction <add>, %70, %cst_30 [1] : vector<16x128xf32> to vector<16xf32>
    %72 = vector.shape_cast %71 : vector<16xf32> to vector<16x1xf32>
    %73 = tpu.reciprocal %72 : vector<16x1xf32> -> vector<16x1xf32>
    %74 = vector.broadcast %73 : vector<16x1xf32> to vector<16x128xf32>
    %75 = arith.mulf %70, %74 : vector<16x128xf32>
    %76 = vector.shape_cast %67 : vector<16xi32> to vector<16x1xi32>
    %77 = vector.broadcast %76 : vector<16x1xi32> to vector<16x128xi32>
    %78 = arith.cmpi eq, %2, %77 : vector<16x128xi32>
    %79 = arith.extui %78 : vector<16x128xi1> to vector<16x128xi32>
    %80 = arith.sitofp %79 : vector<16x128xi32> to vector<16x128xf32>
    %cst_31 = arith.constant dense<0.000000e+00> : vector<16x128xf32>
    %81 = tpu.matmul %80, %52, %cst_31 {dimension_numbers = #tpu.dot_dimension_numbers<[1], [0], [0], [1], [0, 0, 1, 1], [], []>} : vector<16x128xf32>, vector<128x128xf32>, vector<16x128xf32> -> vector<16x128xf32>
    %82 = arith.mulf %49, %49 : vector<16x128xf32>
    %cst_32 = arith.constant dense<0.000000e+00> : vector<16xf32>
    %83 = vector.multi_reduction <add>, %82, %cst_32 [1] : vector<16x128xf32> to vector<16xf32>
    %84 = vector.shape_cast %62 : vector<16x1xf32> to vector<16xf32>
    %85 = arith.addf %84, %83 : vector<16xf32>
    %cst_33 = arith.constant 3.156250e-02 : f32
    %86 = vector.broadcast %cst_33 : f32 to vector<16xf32>
    %87 = arith.mulf %86, %85 : vector<16xf32>
    %c1_34 = arith.constant 1 : index
    %c0_35 = arith.constant 0 : index
    %88 = vector.load %arg4[%c1_34, %c0_35] : memref<3x16xi32, #tpu.memory_space<vmem>>, vector<1x16xi32>
    %89 = vector.shape_cast %88 : vector<1x16xi32> to vector<16xi32>
    %90 = vector.shape_cast %67 : vector<16xi32> to vector<1x16xi32>
    tpu.vector_store %arg4[%c1_34, %c0_35], %90 {strides = array<i32>} : memref<3x16xi32, #tpu.memory_space<vmem>>, vector<1x16xi32>,
    %c1_36 = arith.constant 1 : index
    %c0_37 = arith.constant 0 : index
    %c0_38 = arith.constant 0 : index
    %91 = vector.load %arg5[%c1_36, %c0_37, %c0_38] : memref<3x16x128xf32, #tpu.memory_space<vmem>>, vector<1x16x128xf32>
    %92 = vector.shape_cast %91 : vector<1x16x128xf32> to vector<16x128xf32>
    %93 = vector.shape_cast %75 : vector<16x128xf32> to vector<1x16x128xf32>
    tpu.vector_store %arg5[%c1_36, %c0_37, %c0_38], %93 {strides = array<i32>} : memref<3x16x128xf32, #tpu.memory_space<vmem>>, vector<1x16x128xf32>,
    %c1_39 = arith.constant 1 : index
    %c0_40 = arith.constant 0 : index
    %94 = vector.load %arg7[%c1_39, %c0_40] : memref<3x16xf32, #tpu.memory_space<vmem>>, vector<1x16xf32>
    %95 = vector.shape_cast %94 : vector<1x16xf32> to vector<16xf32>
    %96 = vector.shape_cast %87 : vector<16xf32> to vector<1x16xf32>
    tpu.vector_store %arg7[%c1_39, %c0_40], %96 {strides = array<i32>} : memref<3x16xf32, #tpu.memory_space<vmem>>, vector<1x16xf32>,
    %97 = arith.subf %49, %81 : vector<16x128xf32>
    %98 = arith.addf %50, %81 : vector<16x128xf32>
    %c2 = arith.constant 2 : index
    %c0_41 = arith.constant 0 : index
    %c0_42 = arith.constant 0 : index
    %99 = vector.load %arg2[%c2, %c0_41, %c0_42] : memref<3x128x128xf32, #tpu.memory_space<vmem>>, vector<1x128x128xf32>
    %100 = vector.shape_cast %99 : vector<1x128x128xf32> to vector<128x128xf32>
    %c2_43 = arith.constant 2 : index
    %c0_44 = arith.constant 0 : index
    %101 = vector.load %arg3[%c2_43, %c0_44] : memref<3x128xf32, #tpu.memory_space<vmem>>, vector<1x128xf32>
    %102 = vector.shape_cast %101 : vector<1x128xf32> to vector<128xf32>
    %cst_45 = arith.constant dense<0.000000e+00> : vector<16x128xf32>
    %103 = tpu.matmul %97, %100, %cst_45 {dimension_numbers = #tpu.dot_dimension_numbers<[1], [1], [0], [0], [0, 0, 1, 0], [], []>} : vector<16x128xf32>, vector<128x128xf32>, vector<16x128xf32> -> vector<16x128xf32>
    %104 = vector.shape_cast %102 : vector<128xf32> to vector<1x128xf32>
    %cst_46 = arith.constant 2.000000e+00 : f32
    %105 = vector.broadcast %cst_46 : f32 to vector<16x128xf32>
    %106 = arith.mulf %105, %103 : vector<16x128xf32>
    %107 = vector.broadcast %104 : vector<1x128xf32> to vector<16x128xf32>
    %108 = arith.subf %107, %106 : vector<16x128xf32>
    %cst_47 = arith.constant dense<0x7F800000> : vector<16xf32>
    %109 = vector.multi_reduction <minimumf>, %108, %cst_47 [1] : vector<16x128xf32> to vector<16xf32>
    %110 = vector.shape_cast %109 : vector<16xf32> to vector<16x1xf32>
    %111 = vector.broadcast %110 : vector<16x1xf32> to vector<16x128xf32>
    %112 = arith.cmpf oeq, %108, %111 : vector<16x128xf32>
    %c128_i32_48 = arith.constant 128 : i32
    %113 = vector.broadcast %c128_i32_48 : i32 to vector<16x128xi32>
    %114 = arith.select %112, %2, %113 : vector<16x128xi1>, vector<16x128xi32>
    %cst_49 = arith.constant dense<2147483647> : vector<16xi32>
    %115 = vector.multi_reduction <minsi>, %114, %cst_49 [1] : vector<16x128xi32> to vector<16xi32>
    %116 = vector.broadcast %110 : vector<16x1xf32> to vector<16x128xf32>
    %117 = arith.subf %116, %108 : vector<16x128xf32>
    %118 = math.exp %117 : vector<16x128xf32>
    %cst_50 = arith.constant dense<0.000000e+00> : vector<16xf32>
    %119 = vector.multi_reduction <add>, %118, %cst_50 [1] : vector<16x128xf32> to vector<16xf32>
    %120 = vector.shape_cast %119 : vector<16xf32> to vector<16x1xf32>
    %121 = tpu.reciprocal %120 : vector<16x1xf32> -> vector<16x1xf32>
    %122 = vector.broadcast %121 : vector<16x1xf32> to vector<16x128xf32>
    %123 = arith.mulf %118, %122 : vector<16x128xf32>
    %124 = vector.shape_cast %115 : vector<16xi32> to vector<16x1xi32>
    %125 = vector.broadcast %124 : vector<16x1xi32> to vector<16x128xi32>
    %126 = arith.cmpi eq, %2, %125 : vector<16x128xi32>
    %127 = arith.extui %126 : vector<16x128xi1> to vector<16x128xi32>
    %128 = arith.sitofp %127 : vector<16x128xi32> to vector<16x128xf32>
    %cst_51 = arith.constant dense<0.000000e+00> : vector<16x128xf32>
    %129 = tpu.matmul %128, %100, %cst_51 {dimension_numbers = #tpu.dot_dimension_numbers<[1], [0], [0], [1], [0, 0, 1, 1], [], []>} : vector<16x128xf32>, vector<128x128xf32>, vector<16x128xf32> -> vector<16x128xf32>
    %130 = arith.mulf %97, %97 : vector<16x128xf32>
    %cst_52 = arith.constant dense<0.000000e+00> : vector<16xf32>
    %131 = vector.multi_reduction <add>, %130, %cst_52 [1] : vector<16x128xf32> to vector<16xf32>
    %132 = vector.shape_cast %110 : vector<16x1xf32> to vector<16xf32>
    %133 = arith.addf %132, %131 : vector<16xf32>
    %cst_53 = arith.constant 3.156250e-02 : f32
    %134 = vector.broadcast %cst_53 : f32 to vector<16xf32>
    %135 = arith.mulf %134, %133 : vector<16xf32>
    %c2_54 = arith.constant 2 : index
    %c0_55 = arith.constant 0 : index
    %136 = vector.load %arg4[%c2_54, %c0_55] : memref<3x16xi32, #tpu.memory_space<vmem>>, vector<1x16xi32>
    %137 = vector.shape_cast %136 : vector<1x16xi32> to vector<16xi32>
    %138 = vector.shape_cast %115 : vector<16xi32> to vector<1x16xi32>
    tpu.vector_store %arg4[%c2_54, %c0_55], %138 {strides = array<i32>} : memref<3x16xi32, #tpu.memory_space<vmem>>, vector<1x16xi32>,
    %c2_56 = arith.constant 2 : index
    %c0_57 = arith.constant 0 : index
    %c0_58 = arith.constant 0 : index
    %139 = vector.load %arg5[%c2_56, %c0_57, %c0_58] : memref<3x16x128xf32, #tpu.memory_space<vmem>>, vector<1x16x128xf32>
    %140 = vector.shape_cast %139 : vector<1x16x128xf32> to vector<16x128xf32>
    %141 = vector.shape_cast %123 : vector<16x128xf32> to vector<1x16x128xf32>
    tpu.vector_store %arg5[%c2_56, %c0_57, %c0_58], %141 {strides = array<i32>} : memref<3x16x128xf32, #tpu.memory_space<vmem>>, vector<1x16x128xf32>,
    %c2_59 = arith.constant 2 : index
    %c0_60 = arith.constant 0 : index
    %142 = vector.load %arg7[%c2_59, %c0_60] : memref<3x16xf32, #tpu.memory_space<vmem>>, vector<1x16xf32>
    %143 = vector.shape_cast %142 : vector<1x16xf32> to vector<16xf32>
    %144 = vector.shape_cast %135 : vector<16xf32> to vector<1x16xf32>
    tpu.vector_store %arg7[%c2_59, %c0_60], %144 {strides = array<i32>} : memref<3x16xf32, #tpu.memory_space<vmem>>, vector<1x16xf32>,
    %145 = arith.addf %98, %129 : vector<16x128xf32>
    %c0_61 = arith.constant 0 : index
    %c0_62 = arith.constant 0 : index
    %146 = vector.load %arg6[%c0_61, %c0_62] : memref<16x128xf32, #tpu.memory_space<vmem>>, vector<16x128xf32>
    tpu.vector_store %arg6[%c0_61, %c0_62], %145 {strides = array<i32>} : memref<16x128xf32, #tpu.memory_space<vmem>>, vector<16x128xf32>,
    return
  }
  func.func @transform_0(%arg0: i32) -> (i32, i32) {
    %c0_i32 = arith.constant 0 : i32
    %c0_i32_0 = arith.constant 0 : i32
    return %arg0, %c0_i32 : i32, i32
  }
  func.func @transform_1(%arg0: i32) -> (i32, i32, i32) {
    %c0_i32 = arith.constant 0 : i32
    %c0_i32_0 = arith.constant 0 : i32
    %c0_i32_1 = arith.constant 0 : i32
    %c0_i32_2 = arith.constant 0 : i32
    return %c0_i32, %c0_i32_0, %c0_i32_1 : i32, i32, i32
  }
  func.func @transform_2(%arg0: i32) -> (i32, i32) {
    %c0_i32 = arith.constant 0 : i32
    %c0_i32_0 = arith.constant 0 : i32
    %c0_i32_1 = arith.constant 0 : i32
    return %c0_i32, %c0_i32_0 : i32, i32
  }
  func.func @transform_3(%arg0: i32) -> (i32, i32) {
    %c0_i32 = arith.constant 0 : i32
    %c0_i32_0 = arith.constant 0 : i32
    return %c0_i32, %arg0 : i32, i32
  }
  func.func @transform_4(%arg0: i32) -> (i32, i32, i32) {
    %c0_i32 = arith.constant 0 : i32
    %c0_i32_0 = arith.constant 0 : i32
    %c0_i32_1 = arith.constant 0 : i32
    return %c0_i32, %arg0, %c0_i32_0 : i32, i32, i32
  }
  func.func @transform_5(%arg0: i32) -> (i32, i32) {
    %c0_i32 = arith.constant 0 : i32
    %c0_i32_0 = arith.constant 0 : i32
    return %arg0, %c0_i32 : i32, i32
  }
  func.func @transform_6(%arg0: i32) -> (i32, i32) {
    %c0_i32 = arith.constant 0 : i32
    %c0_i32_0 = arith.constant 0 : i32
    return %c0_i32, %arg0 : i32, i32
  }
}

module attributes {stable_mosaic.version = 11 : i64} {
  func.func @rvq_kernel(%arg0: i32, %arg1: memref<16x128xf32, #tpu.memory_space<vmem>>, %arg2: memref<3x128x128xf32, #tpu.memory_space<vmem>>, %arg3: memref<3x128xf32, #tpu.memory_space<vmem>>, %arg4: memref<3x16xi32, #tpu.memory_space<vmem>>, %arg5: memref<3x16x128xf32, #tpu.memory_space<vmem>>, %arg6: memref<16x128xf32, #tpu.memory_space<vmem>>, %arg7: memref<3x16xf32, #tpu.memory_space<vmem>>) attributes {dimension_semantics = [#tpu.dimension_semantics<parallel>], iteration_bounds = array<i64: 1>, scalar_prefetch = 0 : i64, scratch_operands = 0 : i64, tpu.core_type = #tpu.core_type<tc>, window_params = [{transform_indices = @transform_0, window_bounds = array<i64: 16, 128>}, {pipeline_mode = #tpu.pipeline_mode<synchronous>, transform_indices = @transform_1, window_bounds = array<i64: 3, 128, 128>}, {pipeline_mode = #tpu.pipeline_mode<synchronous>, transform_indices = @transform_2, window_bounds = array<i64: 3, 128>}, {transform_indices = @transform_3, window_bounds = array<i64: 3, 16>}, {transform_indices = @transform_4, window_bounds = array<i64: 3, 16, 128>}, {transform_indices = @transform_5, window_bounds = array<i64: 16, 128>}, {transform_indices = @transform_6, window_bounds = array<i64: 3, 16>}]} {
    %c0 = arith.constant 0 : index
    %c0_0 = arith.constant 0 : index
    %0 = vector.load %arg1[%c0, %c0_0] : memref<16x128xf32, #tpu.memory_space<vmem>>, vector<16x128xf32>
    %cst = arith.constant 0.000000e+00 : f32
    %1 = vector.broadcast %cst : f32 to vector<16x128xf32>
    %2 = tpu.iota {dimensions = array<i32: 1>} : vector<16x128xi32>
    %c0_1 = arith.constant 0 : index
    %c0_2 = arith.constant 0 : index
    %c0_3 = arith.constant 0 : index
    %3 = vector.load %arg2[%c0_1, %c0_2, %c0_3] : memref<3x128x128xf32, #tpu.memory_space<vmem>>, vector<1x128x128xf32>
    %4 = vector.shape_cast %3 : vector<1x128x128xf32> to vector<128x128xf32>
    %c0_4 = arith.constant 0 : index
    %c0_5 = arith.constant 0 : index
    %5 = vector.load %arg3[%c0_4, %c0_5] : memref<3x128xf32, #tpu.memory_space<vmem>>, vector<1x128xf32>
    %6 = vector.shape_cast %5 : vector<1x128xf32> to vector<128xf32>
    %cst_6 = arith.constant dense<0.000000e+00> : vector<16x128xf32>
    %7 = tpu.matmul %0, %4, %cst_6 {dimension_numbers = #tpu.dot_dimension_numbers<[1], [1], [0], [0], [0, 0, 1, 0], [], []>} : vector<16x128xf32>, vector<128x128xf32>, vector<16x128xf32> -> vector<16x128xf32>
    %8 = vector.shape_cast %6 : vector<128xf32> to vector<1x128xf32>
    %cst_7 = arith.constant 2.000000e+00 : f32
    %9 = vector.broadcast %cst_7 : f32 to vector<16x128xf32>
    %10 = arith.mulf %9, %7 : vector<16x128xf32>
    %11 = vector.broadcast %8 : vector<1x128xf32> to vector<16x128xf32>
    %12 = arith.subf %11, %10 : vector<16x128xf32>
    %cst_8 = arith.constant dense<0x7F800000> : vector<16xf32>
    %13 = vector.multi_reduction <minimumf>, %12, %cst_8 [1] : vector<16x128xf32> to vector<16xf32>
    %14 = vector.shape_cast %13 : vector<16xf32> to vector<16x1xf32>
    %15 = vector.broadcast %14 : vector<16x1xf32> to vector<16x128xf32>
    %16 = arith.cmpf oeq, %12, %15 : vector<16x128xf32>
    %c128_i32 = arith.constant 128 : i32
    %17 = vector.broadcast %c128_i32 : i32 to vector<16x128xi32>
    %18 = arith.select %16, %2, %17 : vector<16x128xi1>, vector<16x128xi32>
    %cst_9 = arith.constant dense<2147483647> : vector<16xi32>
    %19 = vector.multi_reduction <minsi>, %18, %cst_9 [1] : vector<16x128xi32> to vector<16xi32>
    %20 = vector.broadcast %14 : vector<16x1xf32> to vector<16x128xf32>
    %21 = arith.subf %20, %12 : vector<16x128xf32>
    %22 = math.exp %21 : vector<16x128xf32>
    %cst_10 = arith.constant dense<0.000000e+00> : vector<16xf32>
    %23 = vector.multi_reduction <add>, %22, %cst_10 [1] : vector<16x128xf32> to vector<16xf32>
    %24 = vector.shape_cast %23 : vector<16xf32> to vector<16x1xf32>
    %25 = tpu.reciprocal %24 : vector<16x1xf32> -> vector<16x1xf32>
    %26 = vector.broadcast %25 : vector<16x1xf32> to vector<16x128xf32>
    %27 = arith.mulf %22, %26 : vector<16x128xf32>
    %28 = vector.shape_cast %19 : vector<16xi32> to vector<16x1xi32>
    %29 = vector.broadcast %28 : vector<16x1xi32> to vector<16x128xi32>
    %30 = arith.cmpi eq, %2, %29 : vector<16x128xi32>
    %31 = arith.extui %30 : vector<16x128xi1> to vector<16x128xi32>
    %32 = arith.sitofp %31 : vector<16x128xi32> to vector<16x128xf32>
    %cst_11 = arith.constant dense<0.000000e+00> : vector<16x128xf32>
    %33 = tpu.matmul %32, %4, %cst_11 {dimension_numbers = #tpu.dot_dimension_numbers<[1], [0], [0], [1], [0, 0, 1, 1], [], []>} : vector<16x128xf32>, vector<128x128xf32>, vector<16x128xf32> -> vector<16x128xf32>
    %34 = arith.mulf %0, %0 : vector<16x128xf32>
    %cst_12 = arith.constant dense<0.000000e+00> : vector<16xf32>
    %35 = vector.multi_reduction <add>, %34, %cst_12 [1] : vector<16x128xf32> to vector<16xf32>
    %36 = vector.shape_cast %14 : vector<16x1xf32> to vector<16xf32>
    %37 = arith.addf %36, %35 : vector<16xf32>
    %cst_13 = arith.constant 3.156250e-02 : f32
    %38 = vector.broadcast %cst_13 : f32 to vector<16xf32>
    %39 = arith.mulf %38, %37 : vector<16xf32>
    %c0_14 = arith.constant 0 : index
    %c0_15 = arith.constant 0 : index
    %40 = vector.load %arg4[%c0_14, %c0_15] : memref<3x16xi32, #tpu.memory_space<vmem>>, vector<1x16xi32>
    %41 = vector.shape_cast %40 : vector<1x16xi32> to vector<16xi32>
    %42 = vector.shape_cast %19 : vector<16xi32> to vector<1x16xi32>
    tpu.vector_store %arg4[%c0_14, %c0_15], %42 {strides = array<i32>} : memref<3x16xi32, #tpu.memory_space<vmem>>, vector<1x16xi32>,
    %c0_16 = arith.constant 0 : index
    %c0_17 = arith.constant 0 : index
    %c0_18 = arith.constant 0 : index
    %43 = vector.load %arg5[%c0_16, %c0_17, %c0_18] : memref<3x16x128xf32, #tpu.memory_space<vmem>>, vector<1x16x128xf32>
    %44 = vector.shape_cast %43 : vector<1x16x128xf32> to vector<16x128xf32>
    %45 = vector.shape_cast %27 : vector<16x128xf32> to vector<1x16x128xf32>
    tpu.vector_store %arg5[%c0_16, %c0_17, %c0_18], %45 {strides = array<i32>} : memref<3x16x128xf32, #tpu.memory_space<vmem>>, vector<1x16x128xf32>,
    %c0_19 = arith.constant 0 : index
    %c0_20 = arith.constant 0 : index
    %46 = vector.load %arg7[%c0_19, %c0_20] : memref<3x16xf32, #tpu.memory_space<vmem>>, vector<1x16xf32>
    %47 = vector.shape_cast %46 : vector<1x16xf32> to vector<16xf32>
    %48 = vector.shape_cast %39 : vector<16xf32> to vector<1x16xf32>
    tpu.vector_store %arg7[%c0_19, %c0_20], %48 {strides = array<i32>} : memref<3x16xf32, #tpu.memory_space<vmem>>, vector<1x16xf32>,
    %49 = arith.subf %0, %33 : vector<16x128xf32>
    %50 = arith.addf %1, %33 : vector<16x128xf32>
    %c1 = arith.constant 1 : index
    %c0_21 = arith.constant 0 : index
    %c0_22 = arith.constant 0 : index
    %51 = vector.load %arg2[%c1, %c0_21, %c0_22] : memref<3x128x128xf32, #tpu.memory_space<vmem>>, vector<1x128x128xf32>
    %52 = vector.shape_cast %51 : vector<1x128x128xf32> to vector<128x128xf32>
    %c1_23 = arith.constant 1 : index
    %c0_24 = arith.constant 0 : index
    %53 = vector.load %arg3[%c1_23, %c0_24] : memref<3x128xf32, #tpu.memory_space<vmem>>, vector<1x128xf32>
    %54 = vector.shape_cast %53 : vector<1x128xf32> to vector<128xf32>
    %cst_25 = arith.constant dense<0.000000e+00> : vector<16x128xf32>
    %55 = tpu.matmul %49, %52, %cst_25 {dimension_numbers = #tpu.dot_dimension_numbers<[1], [1], [0], [0], [0, 0, 1, 0], [], []>} : vector<16x128xf32>, vector<128x128xf32>, vector<16x128xf32> -> vector<16x128xf32>
    %56 = vector.shape_cast %54 : vector<128xf32> to vector<1x128xf32>
    %cst_26 = arith.constant 2.000000e+00 : f32
    %57 = vector.broadcast %cst_26 : f32 to vector<16x128xf32>
    %58 = arith.mulf %57, %55 : vector<16x128xf32>
    %59 = vector.broadcast %56 : vector<1x128xf32> to vector<16x128xf32>
    %60 = arith.subf %59, %58 : vector<16x128xf32>
    %cst_27 = arith.constant dense<0x7F800000> : vector<16xf32>
    %61 = vector.multi_reduction <minimumf>, %60, %cst_27 [1] : vector<16x128xf32> to vector<16xf32>
    %62 = vector.shape_cast %61 : vector<16xf32> to vector<16x1xf32>
    %63 = vector.broadcast %62 : vector<16x1xf32> to vector<16x128xf32>
    %64 = arith.cmpf oeq, %60, %63 : vector<16x128xf32>
    %c128_i32_28 = arith.constant 128 : i32
    %65 = vector.broadcast %c128_i32_28 : i32 to vector<16x128xi32>
    %66 = arith.select %64, %2, %65 : vector<16x128xi1>, vector<16x128xi32>
    %cst_29 = arith.constant dense<2147483647> : vector<16xi32>
    %67 = vector.multi_reduction <minsi>, %66, %cst_29 [1] : vector<16x128xi32> to vector<16xi32>
    %68 = vector.broadcast %62 : vector<16x1xf32> to vector<16x128xf32>
    %69 = arith.subf %68, %60 : vector<16x128xf32>
    %70 = math.exp %69 : vector<16x128xf32>
    %cst_30 = arith.constant dense<0.000000e+00> : vector<16xf32>
    %71 = vector.multi_reduction <add>, %70, %cst_30 [1] : vector<16x128xf32> to vector<16xf32>
    %72 = vector.shape_cast %71 : vector<16xf32> to vector<16x1xf32>
    %73 = tpu.reciprocal %72 : vector<16x1xf32> -> vector<16x1xf32>
    %74 = vector.broadcast %73 : vector<16x1xf32> to vector<16x128xf32>
    %75 = arith.mulf %70, %74 : vector<16x128xf32>
    %76 = vector.shape_cast %67 : vector<16xi32> to vector<16x1xi32>
    %77 = vector.broadcast %76 : vector<16x1xi32> to vector<16x128xi32>
    %78 = arith.cmpi eq, %2, %77 : vector<16x128xi32>
    %79 = arith.extui %78 : vector<16x128xi1> to vector<16x128xi32>
    %80 = arith.sitofp %79 : vector<16x128xi32> to vector<16x128xf32>
    %cst_31 = arith.constant dense<0.000000e+00> : vector<16x128xf32>
    %81 = tpu.matmul %80, %52, %cst_31 {dimension_numbers = #tpu.dot_dimension_numbers<[1], [0], [0], [1], [0, 0, 1, 1], [], []>} : vector<16x128xf32>, vector<128x128xf32>, vector<16x128xf32> -> vector<16x128xf32>
    %82 = arith.mulf %49, %49 : vector<16x128xf32>
    %cst_32 = arith.constant dense<0.000000e+00> : vector<16xf32>
    %83 = vector.multi_reduction <add>, %82, %cst_32 [1] : vector<16x128xf32> to vector<16xf32>
    %84 = vector.shape_cast %62 : vector<16x1xf32> to vector<16xf32>
    %85 = arith.addf %84, %83 : vector<16xf32>
    %cst_33 = arith.constant 3.156250e-02 : f32
    %86 = vector.broadcast %cst_33 : f32 to vector<16xf32>
    %87 = arith.mulf %86, %85 : vector<16xf32>
    %c1_34 = arith.constant 1 : index
    %c0_35 = arith.constant 0 : index
    %88 = vector.load %arg4[%c1_34, %c0_35] : memref<3x16xi32, #tpu.memory_space<vmem>>, vector<1x16xi32>
    %89 = vector.shape_cast %88 : vector<1x16xi32> to vector<16xi32>
    %90 = vector.shape_cast %67 : vector<16xi32> to vector<1x16xi32>
    tpu.vector_store %arg4[%c1_34, %c0_35], %90 {strides = array<i32>} : memref<3x16xi32, #tpu.memory_space<vmem>>, vector<1x16xi32>,
    %c1_36 = arith.constant 1 : index
    %c0_37 = arith.constant 0 : index
    %c0_38 = arith.constant 0 : index
    %91 = vector.load %arg5[%c1_36, %c0_37, %c0_38] : memref<3x16x128xf32, #tpu.memory_space<vmem>>, vector<1x16x128xf32>
    %92 = vector.shape_cast %91 : vector<1x16x128xf32> to vector<16x128xf32>
    %93 = vector.shape_cast %75 : vector<16x128xf32> to vector<1x16x128xf32>
    tpu.vector_store %arg5[%c1_36, %c0_37, %c0_38], %93 {strides = array<i32>} : memref<3x16x128xf32, #tpu.memory_space<vmem>>, vector<1x16x128xf32>,
    %c1_39 = arith.constant 1 : index
    %c0_40 = arith.constant 0 : index
    %94 = vector.load %arg7[%c1_39, %c0_40] : memref<3x16xf32, #tpu.memory_space<vmem>>, vector<1x16xf32>
    %95 = vector.shape_cast %94 : vector<1x16xf32> to vector<16xf32>
    %96 = vector.shape_cast %87 : vector<16xf32> to vector<1x16xf32>
    tpu.vector_store %arg7[%c1_39, %c0_40], %96 {strides = array<i32>} : memref<3x16xf32, #tpu.memory_space<vmem>>, vector<1x16xf32>,
    %97 = arith.subf %49, %81 : vector<16x128xf32>
    %98 = arith.addf %50, %81 : vector<16x128xf32>
    %c2 = arith.constant 2 : index
    %c0_41 = arith.constant 0 : index
    %c0_42 = arith.constant 0 : index
    %99 = vector.load %arg2[%c2, %c0_41, %c0_42] : memref<3x128x128xf32, #tpu.memory_space<vmem>>, vector<1x128x128xf32>
    %100 = vector.shape_cast %99 : vector<1x128x128xf32> to vector<128x128xf32>
    %c2_43 = arith.constant 2 : index
    %c0_44 = arith.constant 0 : index
    %101 = vector.load %arg3[%c2_43, %c0_44] : memref<3x128xf32, #tpu.memory_space<vmem>>, vector<1x128xf32>
    %102 = vector.shape_cast %101 : vector<1x128xf32> to vector<128xf32>
    %cst_45 = arith.constant dense<0.000000e+00> : vector<16x128xf32>
    %103 = tpu.matmul %97, %100, %cst_45 {dimension_numbers = #tpu.dot_dimension_numbers<[1], [1], [0], [0], [0, 0, 1, 0], [], []>} : vector<16x128xf32>, vector<128x128xf32>, vector<16x128xf32> -> vector<16x128xf32>
    %104 = vector.shape_cast %102 : vector<128xf32> to vector<1x128xf32>
    %cst_46 = arith.constant 2.000000e+00 : f32
    %105 = vector.broadcast %cst_46 : f32 to vector<16x128xf32>
    %106 = arith.mulf %105, %103 : vector<16x128xf32>
    %107 = vector.broadcast %104 : vector<1x128xf32> to vector<16x128xf32>
    %108 = arith.subf %107, %106 : vector<16x128xf32>
    %cst_47 = arith.constant dense<0x7F800000> : vector<16xf32>
    %109 = vector.multi_reduction <minimumf>, %108, %cst_47 [1] : vector<16x128xf32> to vector<16xf32>
    %110 = vector.shape_cast %109 : vector<16xf32> to vector<16x1xf32>
    %111 = vector.broadcast %110 : vector<16x1xf32> to vector<16x128xf32>
    %112 = arith.cmpf oeq, %108, %111 : vector<16x128xf32>
    %c128_i32_48 = arith.constant 128 : i32
    %113 = vector.broadcast %c128_i32_48 : i32 to vector<16x128xi32>
    %114 = arith.select %112, %2, %113 : vector<16x128xi1>, vector<16x128xi32>
    %cst_49 = arith.constant dense<2147483647> : vector<16xi32>
    %115 = vector.multi_reduction <minsi>, %114, %cst_49 [1] : vector<16x128xi32> to vector<16xi32>
    %116 = vector.broadcast %110 : vector<16x1xf32> to vector<16x128xf32>
    %117 = arith.subf %116, %108 : vector<16x128xf32>
    %118 = math.exp %117 : vector<16x128xf32>
    %cst_50 = arith.constant dense<0.000000e+00> : vector<16xf32>
    %119 = vector.multi_reduction <add>, %118, %cst_50 [1] : vector<16x128xf32> to vector<16xf32>
    %120 = vector.shape_cast %119 : vector<16xf32> to vector<16x1xf32>
    %121 = tpu.reciprocal %120 : vector<16x1xf32> -> vector<16x1xf32>
    %122 = vector.broadcast %121 : vector<16x1xf32> to vector<16x128xf32>
    %123 = arith.mulf %118, %122 : vector<16x128xf32>
    %124 = vector.shape_cast %115 : vector<16xi32> to vector<16x1xi32>
    %125 = vector.broadcast %124 : vector<16x1xi32> to vector<16x128xi32>
    %126 = arith.cmpi eq, %2, %125 : vector<16x128xi32>
    %127 = arith.extui %126 : vector<16x128xi1> to vector<16x128xi32>
    %128 = arith.sitofp %127 : vector<16x128xi32> to vector<16x128xf32>
    %cst_51 = arith.constant dense<0.000000e+00> : vector<16x128xf32>
    %129 = tpu.matmul %128, %100, %cst_51 {dimension_numbers = #tpu.dot_dimension_numbers<[1], [0], [0], [1], [0, 0, 1, 1], [], []>} : vector<16x128xf32>, vector<128x128xf32>, vector<16x128xf32> -> vector<16x128xf32>
    %130 = arith.mulf %97, %97 : vector<16x128xf32>
    %cst_52 = arith.constant dense<0.000000e+00> : vector<16xf32>
    %131 = vector.multi_reduction <add>, %130, %cst_52 [1] : vector<16x128xf32> to vector<16xf32>
    %132 = vector.shape_cast %110 : vector<16x1xf32> to vector<16xf32>
    %133 = arith.addf %132, %131 : vector<16xf32>
    %cst_53 = arith.constant 3.156250e-02 : f32
    %134 = vector.broadcast %cst_53 : f32 to vector<16xf32>
    %135 = arith.mulf %134, %133 : vector<16xf32>
    %c2_54 = arith.constant 2 : index
    %c0_55 = arith.constant 0 : index
    %136 = vector.load %arg4[%c2_54, %c0_55] : memref<3x16xi32, #tpu.memory_space<vmem>>, vector<1x16xi32>
    %137 = vector.shape_cast %136 : vector<1x16xi32> to vector<16xi32>
    %138 = vector.shape_cast %115 : vector<16xi32> to vector<1x16xi32>
    tpu.vector_store %arg4[%c2_54, %c0_55], %138 {strides = array<i32>} : memref<3x16xi32, #tpu.memory_space<vmem>>, vector<1x16xi32>,
    %c2_56 = arith.constant 2 : index
    %c0_57 = arith.constant 0 : index
    %c0_58 = arith.constant 0 : index
    %139 = vector.load %arg5[%c2_56, %c0_57, %c0_58] : memref<3x16x128xf32, #tpu.memory_space<vmem>>, vector<1x16x128xf32>
    %140 = vector.shape_cast %139 : vector<1x16x128xf32> to vector<16x128xf32>
    %141 = vector.shape_cast %123 : vector<16x128xf32> to vector<1x16x128xf32>
    tpu.vector_store %arg5[%c2_56, %c0_57, %c0_58], %141 {strides = array<i32>} : memref<3x16x128xf32, #tpu.memory_space<vmem>>, vector<1x16x128xf32>,
    %c2_59 = arith.constant 2 : index
    %c0_60 = arith.constant 0 : index
    %142 = vector.load %arg7[%c2_59, %c0_60] : memref<3x16xf32, #tpu.memory_space<vmem>>, vector<1x16xf32>
    %143 = vector.shape_cast %142 : vector<1x16xf32> to vector<16xf32>
    %144 = vector.shape_cast %135 : vector<16xf32> to vector<1x16xf32>
    tpu.vector_store %arg7[%c2_59, %c0_60], %144 {strides = array<i32>} : memref<3x16xf32, #tpu.memory_space<vmem>>, vector<1x16xf32>,
    %145 = arith.addf %98, %129 : vector<16x128xf32>
    %c0_61 = arith.constant 0 : index
    %c0_62 = arith.constant 0 : index
    %146 = vector.load %arg6[%c0_61, %c0_62] : memref<16x128xf32, #tpu.memory_space<vmem>>, vector<16x128xf32>
    tpu.vector_store %arg6[%c0_61, %c0_62], %145 {strides = array<i32>} : memref<16x128xf32, #tpu.memory_space<vmem>>, vector<16x128xf32>,
    return
  }
  func.func @transform_0(%arg0: i32) -> (i32, i32) {
    %c0_i32 = arith.constant 0 : i32
    %c0_i32_0 = arith.constant 0 : i32
    return %arg0, %c0_i32 : i32, i32
  }
  func.func @transform_1(%arg0: i32) -> (i32, i32, i32) {
    %c0_i32 = arith.constant 0 : i32
    %c0_i32_0 = arith.constant 0 : i32
    %c0_i32_1 = arith.constant 0 : i32
    %c0_i32_2 = arith.constant 0 : i32
    return %c0_i32, %c0_i32_0, %c0_i32_1 : i32, i32, i32
  }
  func.func @transform_2(%arg0: i32) -> (i32, i32) {
    %c0_i32 = arith.constant 0 : i32
    %c0_i32_0 = arith.constant 0 : i32
    %c0_i32_1 = arith.constant 0 : i32
    return %c0_i32, %c0_i32_0 : i32, i32
  }
  func.func @transform_3(%arg0: i32) -> (i32, i32) {
    %c0_i32 = arith.constant 0 : i32
    %c0_i32_0 = arith.constant 0 : i32
    return %c0_i32, %arg0 : i32, i32
  }
  func.func @transform_4(%arg0: i32) -> (i32, i32, i32) {
    %c0_i32 = arith.constant 0 : i32
    %c0_i32_0 = arith.constant 0 : i32
    %c0_i32_1 = arith.constant 0 : i32
    return %c0_i32, %arg0, %c0_i32_0 : i32, i32, i32
  }
  func.func @transform_5(%arg0: i32) -> (i32, i32) {
    %c0_i32 = arith.constant 0 : i32
    %c0_i32_0 = arith.constant 0 : i32
    return %arg0, %c0_i32 : i32, i32
  }
  func.func @transform_6(%arg0: i32) -> (i32, i32) {
    %c0_i32 = arith.constant 0 : i32
    %c0_i32_0 = arith.constant 0 : i32
    return %c0_i32, %arg0 : i32, i32
  }
}

</mosaic_0001>

<llo_original>
// kernel: tpu_custom_call.1
$region0: #{tpu_custom_call.1}
  #allocation0 [shape = 'u32[]', space=smem, size = 0x4, offset = 0x4, fixed_abs, tag = 'smem constant byte address 0x4 - core index']
  #allocation1 [shape = 'u32[144,128]{1,0:T(1,128)}', space=vmem, size = 0x12000, scoped, tag = 'internal scratch']
  %s0 = inlined_call_operand.hbm [shape: f32[16,128], index: 0, kind: input, shape index: {}]
  %s1 = inlined_call_operand.hbm [shape: f32[3,128,128], index: 1, kind: input, shape index: {}]
  %s2 = inlined_call_operand.vmem [shape: f32[3,128], index: 2, kind: input, shape index: {}]
  %s3 = inlined_call_operand.hbm [shape: s32[3,16], index: 3, kind: output, shape index: {0}]
  %s4 = inlined_call_operand.hbm [shape: f32[3,16,128], index: 4, kind: output, shape index: {1}]
  %s5 = inlined_call_operand.hbm [shape: f32[16,128], index: 5, kind: output, shape index: {2}]
  %s6 = inlined_call_operand.hbm [shape: f32[3,16], index: 6, kind: output, shape index: {3}]
  %7 = xla_tuple %s3, %s4, %s5, %s6
  %s8 = sld [smem:[#allocation0]]
  $region54: #{tpu_custom_call.1} parent=0
    _
  %s10 = ssub.s32 1, %s8
  %s11 = scalar_select 0, %s10, %s8
  $region1: #{tpu_custom_call.1} parent=0
    #allocation2 [shape = 'u8[8192]{0}', space=vmem, size = 0x2000, scoped, tag = 'input window, operand 0, single buffered']
    #allocation3 [shape = 's32[1]{0}', space=sflag, size = 0x4, scoped, tag = 'scoped memory for tpu_custom_call.1']
    #allocation4 [shape = 's32[1]{0}', space=sflag, size = 0x4, scoped, tag = 'scoped memory for tpu_custom_call.1']
    #allocation5 [shape = 'u8[196608]{0}', space=vmem, size = 0x30000, scoped, tag = 'input window, operand 1, single buffered']
    #allocation6 [shape = 's32[1]{0}', space=sflag, size = 0x4, scoped, tag = 'scoped memory for tpu_custom_call.1']
    #allocation7 [shape = 'u8[2048]{0}', space=vmem, size = 0x800, scoped, tag = 'output window, operand 0, single buffered']
    #allocation8 [shape = 'u8[24576]{0}', space=vmem, size = 0x6000, scoped, tag = 'output window, operand 1, single buffered']
    #allocation9 [shape = 's32[1]{0}', space=sflag, size = 0x4, scoped, tag = 'scoped memory for tpu_custom_call.1']
    #allocation10 [shape = 'u8[8192]{0}', space=vmem, size = 0x2000, scoped, tag = 'output window, operand 2, single buffered']
    #allocation11 [shape = 'u8[2048]{0}', space=vmem, size = 0x800, scoped, tag = 'output window, operand 3, single buffered']
    #allocation12 [shape = 's32[1]{0}', space=sflag, size = 0x4, scoped, tag = 'scoped memory for tpu_custom_call.1']
    %12 = vsyncpa [#allocation3], 0
    %13 = vsyncpa [#allocation6], 0
    %14 = vsyncpa [#allocation4], 0
    %15 = vsyncpa [#allocation9], 0
    %16 = vsyncpa [#allocation12], 0
    // Predicated region
    $region2: #{tpu_custom_call.1} parent=1 // pred_check
      _
    $region3: #{tpu_custom_call.1} parent=1 // pred_check_branch
      %18 = sbr.rel (0) target = $region5
    $region4: #{tpu_custom_call.1} parent=1 // pred_region
      %s20 = ssub.s32 256, 256
      %21 = vsyncadd [#allocation3], %s20
      %s22 = sshll.u32 [#allocation2], 4
      %s23 = int_to_ptr.vmem [resolvable:$true] %s22
      %28 = dma.hbm_to_vmem [thread:$0]  %s0, 256, %s23, [#allocation3], 128, 128, 8
    $region5: #{tpu_custom_call.1} parent=1 // pred_fallthru
      _
    // Predicated region
    $region6: #{tpu_custom_call.1} parent=1 // pred_check
      _
    $region7: #{tpu_custom_call.1} parent=1 // pred_check_branch
      %30 = sbr.rel (0) target = $region9
    $region8: #{tpu_custom_call.1} parent=1 // pred_region
      %s32 = ssub.s32 6144, 6144
      %33 = vsyncadd [#allocation6], %s32
      %s34 = sshll.u32 [#allocation5], 4
      %s35 = int_to_ptr.vmem [resolvable:$true] %s34
      %40 = dma.hbm_to_vmem [thread:$0]  %s1, 6144, %s35, [#allocation6], 128, 128, 8
    $region9: #{tpu_custom_call.1} parent=1 // pred_fallthru
      _
    // Predicated region
    $region10: #{tpu_custom_call.1} parent=1 // pred_check
      _
    $region11: #{tpu_custom_call.1} parent=1 // pred_check_branch
      %42 = sbr.rel (0) target = $region13
    $region12: #{tpu_custom_call.1} parent=1 // pred_region
      _
    $region13: #{tpu_custom_call.1} parent=1 // pred_fallthru
      _
    // Predicated region
    $region14: #{tpu_custom_call.1} parent=1 // pred_check
      _
    $region15: #{tpu_custom_call.1} parent=1 // pred_check_branch
      %44 = sbr.rel (0) target = $region17
    $region16: #{tpu_custom_call.1} parent=1 // pred_region
      %45 = dma.done [#allocation3], 256
    $region17: #{tpu_custom_call.1} parent=1 // pred_fallthru
      _
    // Predicated region
    $region18: #{tpu_custom_call.1} parent=1 // pred_check
      _
    $region19: #{tpu_custom_call.1} parent=1 // pred_check_branch
      %47 = sbr.rel (0) target = $region21
    $region20: #{tpu_custom_call.1} parent=1 // pred_region
      %48 = dma.done [#allocation6], 6144
    $region21: #{tpu_custom_call.1} parent=1 // pred_fallthru
      _
    %v49 = vld [vmem:[#allocation2] sm:$0xff]
    %v50 = vld [vmem:[#allocation2 + $0x8] sm:$0xff]
    %v51 = vlaneseq
    %v52 = vand.u32 %v51, 127
    %v53 = vld [vmem:[#allocation5] sm:$0xff]
    %v54 = vld [vmem:[#allocation5 + $0x8] sm:$0xff]
    %v55 = vld [vmem:[#allocation5 + $0x10] sm:$0xff]
    %v56 = vld [vmem:[#allocation5 + $0x18] sm:$0xff]
    %v57 = vld [vmem:[#allocation5 + $0x20] sm:$0xff]
    %v58 = vld [vmem:[#allocation5 + $0x28] sm:$0xff]
    %v59 = vld [vmem:[#allocation5 + $0x30] sm:$0xff]
    %v60 = vld [vmem:[#allocation5 + $0x38] sm:$0xff]
    %v61 = vld [vmem:[#allocation5 + $0x40] sm:$0xff]
    %v62 = vld [vmem:[#allocation5 + $0x48] sm:$0xff]
    %v63 = vld [vmem:[#allocation5 + $0x50] sm:$0xff]
    %v64 = vld [vmem:[#allocation5 + $0x58] sm:$0xff]
    %v65 = vld [vmem:[#allocation5 + $0x60] sm:$0xff]
    %v66 = vld [vmem:[#allocation5 + $0x68] sm:$0xff]
    %v67 = vld [vmem:[#allocation5 + $0x70] sm:$0xff]
    %v68 = vld [vmem:[#allocation5 + $0x78] sm:$0xff]
    %v69 = vld [vmem:[%s2] sm:$0x1]
    %70 = vmatprep.subr.mxu0 0.0
    %71 = vmatpush1.xpose.msra.mxu0 %v53
    %72 = vmatprep.subr.mxu0 0.0
    %73 = vmatpush1.xpose.msra.mxu0 %v54
    %74 = vmatprep.subr.mxu0 0.0
    %75 = vmatpush1.xpose.msra.mxu0 %v55
    %76 = vmatprep.subr.mxu0 0.0
    %77 = vmatpush1.xpose.msra.mxu0 %v56
    %78 = vmatprep.subr.mxu0 0.0
    %79 = vmatpush1.xpose.msra.mxu0 %v57
    %80 = vmatprep.subr.mxu0 0.0
    %81 = vmatpush1.xpose.msra.mxu0 %v58
    %82 = vmatprep.subr.mxu0 0.0
    %83 = vmatpush1.xpose.msra.mxu0 %v59
    %84 = vmatprep.subr.mxu0 0.0
    %85 = vmatpush1.xpose.msra.mxu0 %v60
    %86 = vmatprep.subr.mxu0 0.0
    %87 = vmatpush1.xpose.msra.mxu0 %v61
    %88 = vmatprep.subr.mxu0 0.0
    %89 = vmatpush1.xpose.msra.mxu0 %v62
    %90 = vmatprep.subr.mxu0 0.0
    %91 = vmatpush1.xpose.msra.mxu0 %v63
    %92 = vmatprep.subr.mxu0 0.0
    %93 = vmatpush1.xpose.msra.mxu0 %v64
    %94 = vmatprep.subr.mxu0 0.0
    %95 = vmatpush1.xpose.msra.mxu0 %v65
    %96 = vmatprep.subr.mxu0 0.0
    %97 = vmatpush1.xpose.msra.mxu0 %v66
    %98 = vmatprep.subr.mxu0 0.0
    %99 = vmatpush1.xpose.msra.mxu0 %v67
    %100 = vmatprep.subr.mxu0 0.0
    %101 = vmatpush1.xpose.msra.mxu0 %v68
    %102 = vmatprep.subr.mxu0 0.0
    %103 = vmatpush1.xpose.msra.mxu0 0.0
    %104 = vmatprep.subr.mxu0 0.0
    %105 = vmatpush1.xpose.msra.mxu0 0.0
    %106 = vmatprep.subr.mxu0 0.0
    %107 = vmatpush1.xpose.msra.mxu0 0.0
    %108 = vmatprep.subr.mxu0 0.0
    %109 = vmatpush1.xpose.msra.mxu0 0.0
    %110 = vmatprep.subr.mxu0 0.0
    %111 = vmatpush1.xpose.msra.mxu0 0.0
    %112 = vmatprep.subr.mxu0 0.0
    %113 = vmatpush1.xpose.msra.mxu0 0.0
    %114 = vmatprep.subr.mxu0 0.0
    %115 = vmatpush1.xpose.msra.mxu0 0.0
    %116 = vmatprep.subr.mxu0 0.0
    %117 = vmatpush1.xpose.msra.mxu0 0.0
    %118 = vmatprep.subr.mxu0 0.0
    %119 = vmatpush1.xpose.msra.mxu0 0.0
    %120 = vmatprep.subr.mxu0 0.0
    %121 = vmatpush1.xpose.msra.mxu0 0.0
    %122 = vmatprep.subr.mxu0 0.0
    %123 = vmatpush1.xpose.msra.mxu0 0.0
    %124 = vmatprep.subr.mxu0 0.0
    %125 = vmatpush1.xpose.msra.mxu0 0.0
    %126 = vmatprep.subr.mxu0 0.0
    %127 = vmatpush1.xpose.msra.mxu0 0.0
    %128 = vmatprep.subr.mxu0 0.0
    %129 = vmatpush1.xpose.msra.mxu0 0.0
    %130 = vmatprep.subr.mxu0 0.0
    %131 = vmatpush1.xpose.msra.mxu0 0.0
    %132 = vmatprep.subr.mxu0 0.0
    %133 = vmatpush1.xpose.msra.mxu0 0.0
    %134 = vmatprep.mubr.f32.mxu0 0.0
    %135 = vmatmul.mubr.f32.gmra.mrb[0].mxu0 %v49
    %v136 = vpop.f32.mrb[0].mxu0
    %v137 = vadd.f32 0.0, %v136
    %v138 = vpop.f32.mrb[0].mxu0
    %139 = vmatprep.mubr.f32.mxu0 0.0
    %140 = vmatmul.mubr.f32.gmra.mrb[0].mxu0 %v50
    %v141 = vpop.f32.mrb[0].mxu0
    %v142 = vadd.f32 0.0, %v141
    %v143 = vpop.f32.mrb[0].mxu0
    %144 = vdwg.mxu0
    %v145 = vmul.f32 %v137, 2.0
    %v146 = vmul.f32 %v142, 2.0
    %v147 = vlaneseq
    %v148 = vshrl.u32 %v147, 7
    %v149 = vsub.s32 0, %v148
    %v150 = vrot.slane %v69, %v149
    %v151 = vsub.f32 %v150, %v145
    %v152 = vsub.f32 %v150, %v146
    %153 = vmin.xlane.f32.xlu0 %v151
    %v154 = vpop.xlane.xlu0 %153
    %155 = vmin.xlane.f32.xlu0 %v152
    %v156 = vpop.xlane.xlu0 %155
    %vm157 = vcmp.eq.f32.partialorder %v151, %v154
    %vm158 = vcmp.eq.f32.partialorder %v152, %v156
    %v159 = vsel %vm157, %v52, 128
    %v160 = vsel %vm158, %v52, 128
    %v161 = vand.u32 %v159, 65535
    %v162 = vshra.s32 %v159, 16
    %v163 = vcvt.s32.f32 %v161
    %v164 = vcvt.s32.f32 %v162
    %165 = vmin.xlane.f32.xlu0 %v164
    %v166 = vpop.xlane.xlu0 %165
    %vm167 = vcmp.eq.f32.partialorder %v164, %v166
    %v168 = vsel %vm167, %v163, inf
    %169 = vmin.xlane.f32.xlu0 %v168
    %v170 = vpop.xlane.xlu0 %169
    %v171 = vcvt.f32.s32 %v170
    %v172 = vcvt.f32.s32 %v166
    %v173 = vshll.u32 %v172, 16
    %v174 = vadd.s32 %v173, %v171
    %v175 = vand.u32 %v160, 65535
    %v176 = vshra.s32 %v160, 16
    %v177 = vcvt.s32.f32 %v175
    %v178 = vcvt.s32.f32 %v176
    %179 = vmin.xlane.f32.xlu0 %v178
    %v180 = vpop.xlane.xlu0 %179
    %vm181 = vcmp.eq.f32.partialorder %v178, %v180
    %v182 = vsel %vm181, %v177, inf
    %183 = vmin.xlane.f32.xlu0 %v182
    %v184 = vpop.xlane.xlu0 %183
    %v185 = vcvt.f32.s32 %v184
    %v186 = vcvt.f32.s32 %v180
    %v187 = vshll.u32 %v186, 16
    %v188 = vadd.s32 %v187, %v185
    %v189 = vsub.f32 %v154, %v151
    %v190 = vsub.f32 %v156, %v152
    %v191 = vmul.f32 %v189, 1.442695
    %v192 = vpow.pop %v191
    %v193 = vmul.f32 %v190, 1.442695
    %v194 = vpow.pop %v193
    %195 = vadd.xlane.f32.xlu0 %v192
    %v196 = vpop.xlane.xlu0 %195
    %197 = vadd.xlane.f32.xlu0 %v194
    %v198 = vpop.xlane.xlu0 %197
    %v199 = vrcp.pop %v196
    %v200 = vrcp.pop %v198
    %v201 = vmul.f32 %v192, %v199
    %v202 = vmul.f32 %v194, %v200
    %vm203 = vcmp.eq.s32.totalorder %v52, %v174
    %vm204 = vcmp.eq.s32.totalorder %v52, %v188
    %v205 = vsel %vm203, 1, 0
    %v206 = vsel %vm204, 1, 0
    %v207 = vcvt.s32.f32 %v205
    %v208 = vcvt.s32.f32 %v206
    %209 = vmatprep.subr.mxu0 0.0
    %210 = vmatpush1.msra.mxu0 %v53
    %211 = vmatprep.subr.mxu0 0.0
    %212 = vmatpush1.msra.mxu0 %v54
    %213 = vmatprep.subr.mxu0 0.0
    %214 = vmatpush1.msra.mxu0 %v55
    %215 = vmatprep.subr.mxu0 0.0
    %216 = vmatpush1.msra.mxu0 %v56
    %217 = vmatprep.subr.mxu0 0.0
    %218 = vmatpush1.msra.mxu0 %v57
    %219 = vmatprep.subr.mxu0 0.0
    %220 = vmatpush1.msra.mxu0 %v58
    %221 = vmatprep.subr.mxu0 0.0
    %222 = vmatpush1.msra.mxu0 %v59
    %223 = vmatprep.subr.mxu0 0.0
    %224 = vmatpush1.msra.mxu0 %v60
    %225 = vmatprep.subr.mxu0 0.0
    %226 = vmatpush1.msra.mxu0 %v61
    %227 = vmatprep.subr.mxu0 0.0
    %228 = vmatpush1.msra.mxu0 %v62
    %229 = vmatprep.subr.mxu0 0.0
    %230 = vmatpush1.msra.mxu0 %v63
    %231 = vmatprep.subr.mxu0 0.0
    %232 = vmatpush1.msra.mxu0 %v64
    %233 = vmatprep.subr.mxu0 0.0
    %234 = vmatpush1.msra.mxu0 %v65
    %235 = vmatprep.subr.mxu0 0.0
    %236 = vmatpush1.msra.mxu0 %v66
    %237 = vmatprep.subr.mxu0 0.0
    %238 = vmatpush1.msra.mxu0 %v67
    %239 = vmatprep.subr.mxu0 0.0
    %240 = vmatpush1.msra.mxu0 %v68
    %241 = vmatprep.subr.mxu0 0.0
    %242 = vmatpush1.msra.mxu0 0.0
    %243 = vmatprep.subr.mxu0 0.0
    %244 = vmatpush1.msra.mxu0 0.0
    %245 = vmatprep.subr.mxu0 0.0
    %246 = vmatpush1.msra.mxu0 0.0
    %247 = vmatprep.subr.mxu0 0.0
    %248 = vmatpush1.msra.mxu0 0.0
    %249 = vmatprep.subr.mxu0 0.0
    %250 = vmatpush1.msra.mxu0 0.0
    %251 = vmatprep.subr.mxu0 0.0
    %252 = vmatpush1.msra.mxu0 0.0
    %253 = vmatprep.subr.mxu0 0.0
    %254 = vmatpush1.msra.mxu0 0.0
    %255 = vmatprep.subr.mxu0 0.0
    %256 = vmatpush1.msra.mxu0 0.0
    %257 = vmatprep.subr.mxu0 0.0
    %258 = vmatpush1.msra.mxu0 0.0
    %259 = vmatprep.subr.mxu0 0.0
    %260 = vmatpush1.msra.mxu0 0.0
    %261 = vmatprep.subr.mxu0 0.0
    %262 = vmatpush1.msra.mxu0 0.0
    %263 = vmatprep.subr.mxu0 0.0
    %264 = vmatpush1.msra.mxu0 0.0
    %265 = vmatprep.subr.mxu0 0.0
    %266 = vmatpush1.msra.mxu0 0.0
    %267 = vmatprep.subr.mxu0 0.0
    %268 = vmatpush1.msra.mxu0 0.0
    %269 = vmatprep.subr.mxu0 0.0
    %270 = vmatpush1.msra.mxu0 0.0
    %271 = vmatprep.subr.mxu0 0.0
    %272 = vmatpush1.msra.mxu0 0.0
    %273 = vmatprep.mubr.f32.mxu0 0.0
    %274 = vmatmul.mubr.f32.gmra.mrb[0].mxu0 %v207
    %v275 = vpop.f32.mrb[0].mxu0
    %v276 = vadd.f32 0.0, %v275
    %v277 = vpop.f32.mrb[0].mxu0
    %278 = vmatprep.mubr.f32.mxu0 0.0
    %279 = vmatmul.mubr.f32.gmra.mrb[0].mxu0 %v208
    %v280 = vpop.f32.mrb[0].mxu0
    %v281 = vadd.f32 0.0, %v280
    %v282 = vpop.f32.mrb[0].mxu0
    %283 = vdwg.mxu0
    %v284 = vmul.f32 %v49, %v49
    %v285 = vmul.f32 %v50, %v50
    %286 = vadd.xlane.f32.xlu0 %v284
    %v287 = vpop.xlane.xlu0 %286
    %288 = vadd.xlane.f32.xlu0 %v285
    %v289 = vpop.xlane.xlu0 %288
    %v290 = vadd.f32 %v154, %v287
    %v291 = vadd.f32 %v156, %v289
    %v292 = vmul.f32 %v290, 0.0315625
    %v293 = vmul.f32 %v291, 0.0315625
    %v294 = vlaneseq
    %v295 = vshrl.u32 %v294, 7
    %v296 = vsub.s32 %v52, %v295
    %v297 = vrot.slane %v174, %v296
    %v298 = vadd.s32 %v52, 4294967288
    %v299 = vlaneseq
    %v300 = vshrl.u32 %v299, 7
    %v301 = vsub.s32 %v298, %v300
    %v302 = vrot.slane %v188, %v301
    %vm303 = vcmask 130112
    %v304 = vsel %vm303, %v302, %v297
    %vm305 = vcmask 122880
    %306 = vst.msk [vmem:[#allocation7] sm:$0x1] %vm305, %v304
    %307 = vst [vmem:[#allocation8] sm:$0xff] %v201
    %308 = vst [vmem:[#allocation8 + $0x8] sm:$0xff] %v202
    %v311 = vlaneseq
    %v312 = vshrl.u32 %v311, 7
    %v313 = vsub.s32 %v52, %v312
    %v314 = vrot.slane %v292, %v313
    %v315 = vlaneseq
    %v316 = vshrl.u32 %v315, 7
    %v317 = vsub.s32 %v298, %v316
    %v318 = vrot.slane %v293, %v317
    %v319 = vsel %vm303, %v318, %v314
    %321 = vst.msk [vmem:[#allocation11] sm:$0x1] %vm305, %v319
    %v322 = vsub.f32 %v49, %v276
    %v323 = vsub.f32 %v50, %v281
    %v324 = vadd.f32 %v276, 0.0
    %v325 = vadd.f32 %v281, 0.0
    %s326 = scalar_lea.vmem [#allocation5], 128
    %v327 = vld [vmem:[%s326] sm:$0xff]
    %v328 = vld [vmem:[%s326 + $0x8] sm:$0xff]
    %v329 = vld [vmem:[%s326 + $0x10] sm:$0xff]
    %v330 = vld [vmem:[%s326 + $0x18] sm:$0xff]
    %v331 = vld [vmem:[%s326 + $0x20] sm:$0xff]
    %v332 = vld [vmem:[%s326 + $0x28] sm:$0xff]
    %v333 = vld [vmem:[%s326 + $0x30] sm:$0xff]
    %v334 = vld [vmem:[%s326 + $0x38] sm:$0xff]
    %v335 = vld [vmem:[%s326 + $0x40] sm:$0xff]
    %v336 = vld [vmem:[%s326 + $0x48] sm:$0xff]
    %v337 = vld [vmem:[%s326 + $0x50] sm:$0xff]
    %v338 = vld [vmem:[%s326 + $0x58] sm:$0xff]
    %v339 = vld [vmem:[%s326 + $0x60] sm:$0xff]
    %v340 = vld [vmem:[%s326 + $0x68] sm:$0xff]
    %v341 = vld [vmem:[%s326 + $0x70] sm:$0xff]
    %v342 = vld [vmem:[%s326 + $0x78] sm:$0xff]
    %v343 = vld [vmem:[%s2 + $0x1] sm:$0x1]
    %344 = vmatprep.subr.mxu0 0.0
    %345 = vmatpush1.xpose.msra.mxu0 %v327
    %346 = vmatprep.subr.mxu0 0.0
    %347 = vmatpush1.xpose.msra.mxu0 %v328
    %348 = vmatprep.subr.mxu0 0.0
    %349 = vmatpush1.xpose.msra.mxu0 %v329
    %350 = vmatprep.subr.mxu0 0.0
    %351 = vmatpush1.xpose.msra.mxu0 %v330
    %352 = vmatprep.subr.mxu0 0.0
    %353 = vmatpush1.xpose.msra.mxu0 %v331
    %354 = vmatprep.subr.mxu0 0.0
    %355 = vmatpush1.xpose.msra.mxu0 %v332
    %356 = vmatprep.subr.mxu0 0.0
    %357 = vmatpush1.xpose.msra.mxu0 %v333
    %358 = vmatprep.subr.mxu0 0.0
    %359 = vmatpush1.xpose.msra.mxu0 %v334
    %360 = vmatprep.subr.mxu0 0.0
    %361 = vmatpush1.xpose.msra.mxu0 %v335
    %362 = vmatprep.subr.mxu0 0.0
    %363 = vmatpush1.xpose.msra.mxu0 %v336
    %364 = vmatprep.subr.mxu0 0.0
    %365 = vmatpush1.xpose.msra.mxu0 %v337
    %366 = vmatprep.subr.mxu0 0.0
    %367 = vmatpush1.xpose.msra.mxu0 %v338
    %368 = vmatprep.subr.mxu0 0.0
    %369 = vmatpush1.xpose.msra.mxu0 %v339
    %370 = vmatprep.subr.mxu0 0.0
    %371 = vmatpush1.xpose.msra.mxu0 %v340
    %372 = vmatprep.subr.mxu0 0.0
    %373 = vmatpush1.xpose.msra.mxu0 %v341
    %374 = vmatprep.subr.mxu0 0.0
    %375 = vmatpush1.xpose.msra.mxu0 %v342
    %376 = vmatprep.subr.mxu0 0.0
    %377 = vmatpush1.xpose.msra.mxu0 0.0
    %378 = vmatprep.subr.mxu0 0.0
    %379 = vmatpush1.xpose.msra.mxu0 0.0
    %380 = vmatprep.subr.mxu0 0.0
    %381 = vmatpush1.xpose.msra.mxu0 0.0
    %382 = vmatprep.subr.mxu0 0.0
    %383 = vmatpush1.xpose.msra.mxu0 0.0
    %384 = vmatprep.subr.mxu0 0.0
    %385 = vmatpush1.xpose.msra.mxu0 0.0
    %386 = vmatprep.subr.mxu0 0.0
    %387 = vmatpush1.xpose.msra.mxu0 0.0
    %388 = vmatprep.subr.mxu0 0.0
    %389 = vmatpush1.xpose.msra.mxu0 0.0
    %390 = vmatprep.subr.mxu0 0.0
    %391 = vmatpush1.xpose.msra.mxu0 0.0
    %392 = vmatprep.subr.mxu0 0.0
    %393 = vmatpush1.xpose.msra.mxu0 0.0
    %394 = vmatprep.subr.mxu0 0.0
    %395 = vmatpush1.xpose.msra.mxu0 0.0
    %396 = vmatprep.subr.mxu0 0.0
    %397 = vmatpush1.xpose.msra.mxu0 0.0
    %398 = vmatprep.subr.mxu0 0.0
    %399 = vmatpush1.xpose.msra.mxu0 0.0
    %400 = vmatprep.subr.mxu0 0.0
    %401 = vmatpush1.xpose.msra.mxu0 0.0
    %402 = vmatprep.subr.mxu0 0.0
    %403 = vmatpush1.xpose.msra.mxu0 0.0
    %404 = vmatprep.subr.mxu0 0.0
    %405 = vmatpush1.xpose.msra.mxu0 0.0
    %406 = vmatprep.subr.mxu0 0.0
    %407 = vmatpush1.xpose.msra.mxu0 0.0
    %408 = vmatprep.mubr.f32.mxu0 0.0
    %409 = vmatmul.mubr.f32.gmra.mrb[0].mxu0 %v322
    %v410 = vpop.f32.mrb[0].mxu0
    %v411 = vadd.f32 0.0, %v410
    %v412 = vpop.f32.mrb[0].mxu0
    %413 = vmatprep.mubr.f32.mxu0 0.0
    %414 = vmatmul.mubr.f32.gmra.mrb[0].mxu0 %v323
    %v415 = vpop.f32.mrb[0].mxu0
    %v416 = vadd.f32 0.0, %v415
    %v417 = vpop.f32.mrb[0].mxu0
    %418 = vdwg.mxu0
    %v419 = vmul.f32 %v411, 2.0
    %v420 = vmul.f32 %v416, 2.0
    %v421 = vlaneseq
    %v422 = vshrl.u32 %v421, 7
    %v423 = vsub.s32 0, %v422
    %v424 = vrot.slane %v343, %v423
    %v425 = vsub.f32 %v424, %v419
    %v426 = vsub.f32 %v424, %v420
    %427 = vmin.xlane.f32.xlu0 %v425
    %v428 = vpop.xlane.xlu0 %427
    %429 = vmin.xlane.f32.xlu0 %v426
    %v430 = vpop.xlane.xlu0 %429
    %vm431 = vcmp.eq.f32.partialorder %v425, %v428
    %vm432 = vcmp.eq.f32.partialorder %v426, %v430
    %v433 = vsel %vm431, %v52, 128
    %v434 = vsel %vm432, %v52, 128
    %v435 = vand.u32 %v433, 65535
    %v436 = vshra.s32 %v433, 16
    %v437 = vcvt.s32.f32 %v435
    %v438 = vcvt.s32.f32 %v436
    %439 = vmin.xlane.f32.xlu0 %v438
    %v440 = vpop.xlane.xlu0 %439
    %vm441 = vcmp.eq.f32.partialorder %v438, %v440
    %v442 = vsel %vm441, %v437, inf
    %443 = vmin.xlane.f32.xlu0 %v442
    %v444 = vpop.xlane.xlu0 %443
    %v445 = vcvt.f32.s32 %v444
    %v446 = vcvt.f32.s32 %v440
    %v447 = vshll.u32 %v446, 16
    %v448 = vadd.s32 %v447, %v445
    %v449 = vand.u32 %v434, 65535
    %v450 = vshra.s32 %v434, 16
    %v451 = vcvt.s32.f32 %v449
    %v452 = vcvt.s32.f32 %v450
    %453 = vmin.xlane.f32.xlu0 %v452
    %v454 = vpop.xlane.xlu0 %453
    %vm455 = vcmp.eq.f32.partialorder %v452, %v454
    %v456 = vsel %vm455, %v451, inf
    %457 = vmin.xlane.f32.xlu0 %v456
    %v458 = vpop.xlane.xlu0 %457
    %v459 = vcvt.f32.s32 %v458
    %v460 = vcvt.f32.s32 %v454
    %v461 = vshll.u32 %v460, 16
    %v462 = vadd.s32 %v461, %v459
    %v463 = vsub.f32 %v428, %v425
    %v464 = vsub.f32 %v430, %v426
    %v465 = vmul.f32 %v463, 1.442695
    %v466 = vpow.pop %v465
    %v467 = vmul.f32 %v464, 1.442695
    %v468 = vpow.pop %v467
    %469 = vadd.xlane.f32.xlu0 %v466
    %v470 = vpop.xlane.xlu0 %469
    %471 = vadd.xlane.f32.xlu0 %v468
    %v472 = vpop.xlane.xlu0 %471
    %v473 = vrcp.pop %v470
    %v474 = vrcp.pop %v472
    %v475 = vmul.f32 %v466, %v473
    %v476 = vmul.f32 %v468, %v474
    %vm477 = vcmp.eq.s32.totalorder %v52, %v448
    %vm478 = vcmp.eq.s32.totalorder %v52, %v462
    %v479 = vsel %vm477, 1, 0
    %v480 = vsel %vm478, 1, 0
    %v481 = vcvt.s32.f32 %v479
    %v482 = vcvt.s32.f32 %v480
    %483 = vmatprep.subr.mxu0 0.0
    %484 = vmatpush1.msra.mxu0 %v327
    %485 = vmatprep.subr.mxu0 0.0
    %486 = vmatpush1.msra.mxu0 %v328
    %487 = vmatprep.subr.mxu0 0.0
    %488 = vmatpush1.msra.mxu0 %v329
    %489 = vmatprep.subr.mxu0 0.0
    %490 = vmatpush1.msra.mxu0 %v330
    %491 = vmatprep.subr.mxu0 0.0
    %492 = vmatpush1.msra.mxu0 %v331
    %493 = vmatprep.subr.mxu0 0.0
    %494 = vmatpush1.msra.mxu0 %v332
    %495 = vmatprep.subr.mxu0 0.0
    %496 = vmatpush1.msra.mxu0 %v333
    %497 = vmatprep.subr.mxu0 0.0
    %498 = vmatpush1.msra.mxu0 %v334
    %499 = vmatprep.subr.mxu0 0.0
    %500 = vmatpush1.msra.mxu0 %v335
    %501 = vmatprep.subr.mxu0 0.0
    %502 = vmatpush1.msra.mxu0 %v336
    %503 = vmatprep.subr.mxu0 0.0
    %504 = vmatpush1.msra.mxu0 %v337
    %505 = vmatprep.subr.mxu0 0.0
    %506 = vmatpush1.msra.mxu0 %v338
    %507 = vmatprep.subr.mxu0 0.0
    %508 = vmatpush1.msra.mxu0 %v339
    %509 = vmatprep.subr.mxu0 0.0
    %510 = vmatpush1.msra.mxu0 %v340
    %511 = vmatprep.subr.mxu0 0.0
    %512 = vmatpush1.msra.mxu0 %v341
    %513 = vmatprep.subr.mxu0 0.0
    %514 = vmatpush1.msra.mxu0 %v342
    %515 = vmatprep.subr.mxu0 0.0
    %516 = vmatpush1.msra.mxu0 0.0
    %517 = vmatprep.subr.mxu0 0.0
    %518 = vmatpush1.msra.mxu0 0.0
    %519 = vmatprep.subr.mxu0 0.0
    %520 = vmatpush1.msra.mxu0 0.0
    %521 = vmatprep.subr.mxu0 0.0
    %522 = vmatpush1.msra.mxu0 0.0
    %523 = vmatprep.subr.mxu0 0.0
    %524 = vmatpush1.msra.mxu0 0.0
    %525 = vmatprep.subr.mxu0 0.0
    %526 = vmatpush1.msra.mxu0 0.0
    %527 = vmatprep.subr.mxu0 0.0
    %528 = vmatpush1.msra.mxu0 0.0
    %529 = vmatprep.subr.mxu0 0.0
    %530 = vmatpush1.msra.mxu0 0.0
    %531 = vmatprep.subr.mxu0 0.0
    %532 = vmatpush1.msra.mxu0 0.0
    %533 = vmatprep.subr.mxu0 0.0
    %534 = vmatpush1.msra.mxu0 0.0
    %535 = vmatprep.subr.mxu0 0.0
    %536 = vmatpush1.msra.mxu0 0.0
    %537 = vmatprep.subr.mxu0 0.0
    %538 = vmatpush1.msra.mxu0 0.0
    %539 = vmatprep.subr.mxu0 0.0
    %540 = vmatpush1.msra.mxu0 0.0
    %541 = vmatprep.subr.mxu0 0.0
    %542 = vmatpush1.msra.mxu0 0.0
    %543 = vmatprep.subr.mxu0 0.0
    %544 = vmatpush1.msra.mxu0 0.0
    %545 = vmatprep.subr.mxu0 0.0
    %546 = vmatpush1.msra.mxu0 0.0
    %547 = vmatprep.mubr.f32.mxu0 0.0
    %548 = vmatmul.mubr.f32.gmra.mrb[0].mxu0 %v481
    %v549 = vpop.f32.mrb[0].mxu0
    %v550 = vadd.f32 0.0, %v549
    %v551 = vpop.f32.mrb[0].mxu0
    %552 = vmatprep.mubr.f32.mxu0 0.0
    %553 = vmatmul.mubr.f32.gmra.mrb[0].mxu0 %v482
    %v554 = vpop.f32.mrb[0].mxu0
    %v555 = vadd.f32 0.0, %v554
    %v556 = vpop.f32.mrb[0].mxu0
    %557 = vdwg.mxu0
    %v558 = vmul.f32 %v322, %v322
    %v559 = vmul.f32 %v323, %v323
    %560 = vadd.xlane.f32.xlu0 %v558
    %v561 = vpop.xlane.xlu0 %560
    %562 = vadd.xlane.f32.xlu0 %v559
    %v563 = vpop.xlane.xlu0 %562
    %v564 = vadd.f32 %v428, %v561
    %v565 = vadd.f32 %v430, %v563
    %v566 = vmul.f32 %v564, 0.0315625
    %v567 = vmul.f32 %v565, 0.0315625
    %v568 = vlaneseq
    %v569 = vshrl.u32 %v568, 7
    %v570 = vsub.s32 %v52, %v569
    %v571 = vrot.slane %v448, %v570
    %v572 = vlaneseq
    %v573 = vshrl.u32 %v572, 7
    %v574 = vsub.s32 %v298, %v573
    %v575 = vrot.slane %v462, %v574
    %v576 = vsel %vm303, %v575, %v571
    %577 = vst.msk [vmem:[#allocation7 + $0x1] sm:$0x1] %vm305, %v576
    %s578 = scalar_lea.vmem [#allocation8], 16
    %579 = vst [vmem:[%s578] sm:$0xff] %v475
    %580 = vst [vmem:[%s578 + $0x8] sm:$0xff] %v476
    %v583 = vlaneseq
    %v584 = vshrl.u32 %v583, 7
    %v585 = vsub.s32 %v52, %v584
    %v586 = vrot.slane %v566, %v585
    %v587 = vlaneseq
    %v588 = vshrl.u32 %v587, 7
    %v589 = vsub.s32 %v298, %v588
    %v590 = vrot.slane %v567, %v589
    %v591 = vsel %vm303, %v590, %v586
    %593 = vst.msk [vmem:[#allocation11 + $0x1] sm:$0x1] %vm305, %v591
    %v594 = vsub.f32 %v322, %v550
    %v595 = vsub.f32 %v323, %v555
    %v596 = vadd.f32 %v324, %v550
    %v597 = vadd.f32 %v325, %v555
    %s598 = scalar_lea.vmem [#allocation5], 256
    %v599 = vld [vmem:[%s598] sm:$0xff]
    %v600 = vld [vmem:[%s598 + $0x8] sm:$0xff]
    %v601 = vld [vmem:[%s598 + $0x10] sm:$0xff]
    %v602 = vld [vmem:[%s598 + $0x18] sm:$0xff]
    %v603 = vld [vmem:[%s598 + $0x20] sm:$0xff]
    %v604 = vld [vmem:[%s598 + $0x28] sm:$0xff]
    %v605 = vld [vmem:[%s598 + $0x30] sm:$0xff]
    %v606 = vld [vmem:[%s598 + $0x38] sm:$0xff]
    %v607 = vld [vmem:[%s598 + $0x40] sm:$0xff]
    %v608 = vld [vmem:[%s598 + $0x48] sm:$0xff]
    %v609 = vld [vmem:[%s598 + $0x50] sm:$0xff]
    %v610 = vld [vmem:[%s598 + $0x58] sm:$0xff]
    %v611 = vld [vmem:[%s598 + $0x60] sm:$0xff]
    %v612 = vld [vmem:[%s598 + $0x68] sm:$0xff]
    %v613 = vld [vmem:[%s598 + $0x70] sm:$0xff]
    %v614 = vld [vmem:[%s598 + $0x78] sm:$0xff]
    %v615 = vld [vmem:[%s2 + $0x2] sm:$0x1]
    %616 = vmatprep.subr.mxu0 0.0
    %617 = vmatpush1.xpose.msra.mxu0 %v599
    %618 = vmatprep.subr.mxu0 0.0
    %619 = vmatpush1.xpose.msra.mxu0 %v600
    %620 = vmatprep.subr.mxu0 0.0
    %621 = vmatpush1.xpose.msra.mxu0 %v601
    %622 = vmatprep.subr.mxu0 0.0
    %623 = vmatpush1.xpose.msra.mxu0 %v602
    %624 = vmatprep.subr.mxu0 0.0
    %625 = vmatpush1.xpose.msra.mxu0 %v603
    %626 = vmatprep.subr.mxu0 0.0
    %627 = vmatpush1.xpose.msra.mxu0 %v604
    %628 = vmatprep.subr.mxu0 0.0
    %629 = vmatpush1.xpose.msra.mxu0 %v605
    %630 = vmatprep.subr.mxu0 0.0
    %631 = vmatpush1.xpose.msra.mxu0 %v606
    %632 = vmatprep.subr.mxu0 0.0
    %633 = vmatpush1.xpose.msra.mxu0 %v607
    %634 = vmatprep.subr.mxu0 0.0
    %635 = vmatpush1.xpose.msra.mxu0 %v608
    %636 = vmatprep.subr.mxu0 0.0
    %637 = vmatpush1.xpose.msra.mxu0 %v609
    %638 = vmatprep.subr.mxu0 0.0
    %639 = vmatpush1.xpose.msra.mxu0 %v610
    %640 = vmatprep.subr.mxu0 0.0
    %641 = vmatpush1.xpose.msra.mxu0 %v611
    %642 = vmatprep.subr.mxu0 0.0
    %643 = vmatpush1.xpose.msra.mxu0 %v612
    %644 = vmatprep.subr.mxu0 0.0
    %645 = vmatpush1.xpose.msra.mxu0 %v613
    %646 = vmatprep.subr.mxu0 0.0
    %647 = vmatpush1.xpose.msra.mxu0 %v614
    %648 = vmatprep.subr.mxu0 0.0
    %649 = vmatpush1.xpose.msra.mxu0 0.0
    %650 = vmatprep.subr.mxu0 0.0
    %651 = vmatpush1.xpose.msra.mxu0 0.0
    %652 = vmatprep.subr.mxu0 0.0
    %653 = vmatpush1.xpose.msra.mxu0 0.0
    %654 = vmatprep.subr.mxu0 0.0
    %655 = vmatpush1.xpose.msra.mxu0 0.0
    %656 = vmatprep.subr.mxu0 0.0
    %657 = vmatpush1.xpose.msra.mxu0 0.0
    %658 = vmatprep.subr.mxu0 0.0
    %659 = vmatpush1.xpose.msra.mxu0 0.0
    %660 = vmatprep.subr.mxu0 0.0
    %661 = vmatpush1.xpose.msra.mxu0 0.0
    %662 = vmatprep.subr.mxu0 0.0
    %663 = vmatpush1.xpose.msra.mxu0 0.0
    %664 = vmatprep.subr.mxu0 0.0
    %665 = vmatpush1.xpose.msra.mxu0 0.0
    %666 = vmatprep.subr.mxu0 0.0
    %667 = vmatpush1.xpose.msra.mxu0 0.0
    %668 = vmatprep.subr.mxu0 0.0
    %669 = vmatpush1.xpose.msra.mxu0 0.0
    %670 = vmatprep.subr.mxu0 0.0
    %671 = vmatpush1.xpose.msra.mxu0 0.0
    %672 = vmatprep.subr.mxu0 0.0
    %673 = vmatpush1.xpose.msra.mxu0 0.0
    %674 = vmatprep.subr.mxu0 0.0
    %675 = vmatpush1.xpose.msra.mxu0 0.0
    %676 = vmatprep.subr.mxu0 0.0
    %677 = vmatpush1.xpose.msra.mxu0 0.0
    %678 = vmatprep.subr.mxu0 0.0
    %679 = vmatpush1.xpose.msra.mxu0 0.0
    %680 = vmatprep.mubr.f32.mxu0 0.0
    %681 = vmatmul.mubr.f32.gmra.mrb[0].mxu0 %v594
    %v682 = vpop.f32.mrb[0].mxu0
    %v683 = vadd.f32 0.0, %v682
    %v684 = vpop.f32.mrb[0].mxu0
    %685 = vmatprep.mubr.f32.mxu0 0.0
    %686 = vmatmul.mubr.f32.gmra.mrb[0].mxu0 %v595
    %v687 = vpop.f32.mrb[0].mxu0
    %v688 = vadd.f32 0.0, %v687
    %v689 = vpop.f32.mrb[0].mxu0
    %690 = vdwg.mxu0
    %v691 = vmul.f32 %v683, 2.0
    %v692 = vmul.f32 %v688, 2.0
    %v693 = vlaneseq
    %v694 = vshrl.u32 %v693, 7
    %v695 = vsub.s32 0, %v694
    %v696 = vrot.slane %v615, %v695
    %v697 = vsub.f32 %v696, %v691
    %v698 = vsub.f32 %v696, %v692
    %699 = vmin.xlane.f32.xlu0 %v697
    %v700 = vpop.xlane.xlu0 %699
    %701 = vmin.xlane.f32.xlu0 %v698
    %v702 = vpop.xlane.xlu0 %701
    %vm703 = vcmp.eq.f32.partialorder %v697, %v700
    %vm704 = vcmp.eq.f32.partialorder %v698, %v702
    %v705 = vsel %vm703, %v52, 128
    %v706 = vsel %vm704, %v52, 128
    %v707 = vand.u32 %v705, 65535
    %v708 = vshra.s32 %v705, 16
    %v709 = vcvt.s32.f32 %v707
    %v710 = vcvt.s32.f32 %v708
    %711 = vmin.xlane.f32.xlu0 %v710
    %v712 = vpop.xlane.xlu0 %711
    %vm713 = vcmp.eq.f32.partialorder %v710, %v712
    %v714 = vsel %vm713, %v709, inf
    %715 = vmin.xlane.f32.xlu0 %v714
    %v716 = vpop.xlane.xlu0 %715
    %v717 = vcvt.f32.s32 %v716
    %v718 = vcvt.f32.s32 %v712
    %v719 = vshll.u32 %v718, 16
    %v720 = vadd.s32 %v719, %v717
    %v721 = vand.u32 %v706, 65535
    %v722 = vshra.s32 %v706, 16
    %v723 = vcvt.s32.f32 %v721
    %v724 = vcvt.s32.f32 %v722
    %725 = vmin.xlane.f32.xlu0 %v724
    %v726 = vpop.xlane.xlu0 %725
    %vm727 = vcmp.eq.f32.partialorder %v724, %v726
    %v728 = vsel %vm727, %v723, inf
    %729 = vmin.xlane.f32.xlu0 %v728
    %v730 = vpop.xlane.xlu0 %729
    %v731 = vcvt.f32.s32 %v730
    %v732 = vcvt.f32.s32 %v726
    %v733 = vshll.u32 %v732, 16
    %v734 = vadd.s32 %v733, %v731
    %v735 = vsub.f32 %v700, %v697
    %v736 = vsub.f32 %v702, %v698
    %v737 = vmul.f32 %v735, 1.442695
    %v738 = vpow.pop %v737
    %v739 = vmul.f32 %v736, 1.442695
    %v740 = vpow.pop %v739
    %741 = vadd.xlane.f32.xlu0 %v738
    %v742 = vpop.xlane.xlu0 %741
    %743 = vadd.xlane.f32.xlu0 %v740
    %v744 = vpop.xlane.xlu0 %743
    %v745 = vrcp.pop %v742
    %v746 = vrcp.pop %v744
    %v747 = vmul.f32 %v738, %v745
    %v748 = vmul.f32 %v740, %v746
    %vm749 = vcmp.eq.s32.totalorder %v52, %v720
    %vm750 = vcmp.eq.s32.totalorder %v52, %v734
    %v751 = vsel %vm749, 1, 0
    %v752 = vsel %vm750, 1, 0
    %v753 = vcvt.s32.f32 %v751
    %v754 = vcvt.s32.f32 %v752
    %755 = vmatprep.subr.mxu0 0.0
    %756 = vmatpush1.msra.mxu0 %v599
    %757 = vmatprep.subr.mxu0 0.0
    %758 = vmatpush1.msra.mxu0 %v600
    %759 = vmatprep.subr.mxu0 0.0
    %760 = vmatpush1.msra.mxu0 %v601
    %761 = vmatprep.subr.mxu0 0.0
    %762 = vmatpush1.msra.mxu0 %v602
    %763 = vmatprep.subr.mxu0 0.0
    %764 = vmatpush1.msra.mxu0 %v603
    %765 = vmatprep.subr.mxu0 0.0
    %766 = vmatpush1.msra.mxu0 %v604
    %767 = vmatprep.subr.mxu0 0.0
    %768 = vmatpush1.msra.mxu0 %v605
    %769 = vmatprep.subr.mxu0 0.0
    %770 = vmatpush1.msra.mxu0 %v606
    %771 = vmatprep.subr.mxu0 0.0
    %772 = vmatpush1.msra.mxu0 %v607
    %773 = vmatprep.subr.mxu0 0.0
    %774 = vmatpush1.msra.mxu0 %v608
    %775 = vmatprep.subr.mxu0 0.0
    %776 = vmatpush1.msra.mxu0 %v609
    %777 = vmatprep.subr.mxu0 0.0
    %778 = vmatpush1.msra.mxu0 %v610
    %779 = vmatprep.subr.mxu0 0.0
    %780 = vmatpush1.msra.mxu0 %v611
    %781 = vmatprep.subr.mxu0 0.0
    %782 = vmatpush1.msra.mxu0 %v612
    %783 = vmatprep.subr.mxu0 0.0
    %784 = vmatpush1.msra.mxu0 %v613
    %785 = vmatprep.subr.mxu0 0.0
    %786 = vmatpush1.msra.mxu0 %v614
    %787 = vmatprep.subr.mxu0 0.0
    %788 = vmatpush1.msra.mxu0 0.0
    %789 = vmatprep.subr.mxu0 0.0
    %790 = vmatpush1.msra.mxu0 0.0
    %791 = vmatprep.subr.mxu0 0.0
    %792 = vmatpush1.msra.mxu0 0.0
    %793 = vmatprep.subr.mxu0 0.0
    %794 = vmatpush1.msra.mxu0 0.0
    %795 = vmatprep.subr.mxu0 0.0
    %796 = vmatpush1.msra.mxu0 0.0
    %797 = vmatprep.subr.mxu0 0.0
    %798 = vmatpush1.msra.mxu0 0.0
    %799 = vmatprep.subr.mxu0 0.0
    %800 = vmatpush1.msra.mxu0 0.0
    %801 = vmatprep.subr.mxu0 0.0
    %802 = vmatpush1.msra.mxu0 0.0
    %803 = vmatprep.subr.mxu0 0.0
    %804 = vmatpush1.msra.mxu0 0.0
    %805 = vmatprep.subr.mxu0 0.0
    %806 = vmatpush1.msra.mxu0 0.0
    %807 = vmatprep.subr.mxu0 0.0
    %808 = vmatpush1.msra.mxu0 0.0
    %809 = vmatprep.subr.mxu0 0.0
    %810 = vmatpush1.msra.mxu0 0.0
    %811 = vmatprep.subr.mxu0 0.0
    %812 = vmatpush1.msra.mxu0 0.0
    %813 = vmatprep.subr.mxu0 0.0
    %814 = vmatpush1.msra.mxu0 0.0
    %815 = vmatprep.subr.mxu0 0.0
    %816 = vmatpush1.msra.mxu0 0.0
    %817 = vmatprep.subr.mxu0 0.0
    %818 = vmatpush1.msra.mxu0 0.0
    %819 = vmatprep.mubr.f32.mxu0 0.0
    %820 = vmatmul.mubr.f32.gmra.mrb[0].mxu0 %v753
    %v821 = vpop.f32.mrb[0].mxu0
    %v822 = vadd.f32 0.0, %v821
    %v823 = vpop.f32.mrb[0].mxu0
    %824 = vmatprep.mubr.f32.mxu0 0.0
    %825 = vmatmul.mubr.f32.gmra.mrb[0].mxu0 %v754
    %v826 = vpop.f32.mrb[0].mxu0
    %v827 = vadd.f32 0.0, %v826
    %v828 = vpop.f32.mrb[0].mxu0
    %829 = vdwg.mxu0
    %v830 = vmul.f32 %v594, %v594
    %v831 = vmul.f32 %v595, %v595
    %832 = vadd.xlane.f32.xlu0 %v830
    %v833 = vpop.xlane.xlu0 %832
    %834 = vadd.xlane.f32.xlu0 %v831
    %v835 = vpop.xlane.xlu0 %834
    %v836 = vadd.f32 %v700, %v833
    %v837 = vadd.f32 %v702, %v835
    %v838 = vmul.f32 %v836, 0.0315625
    %v839 = vmul.f32 %v837, 0.0315625
    %v840 = vlaneseq
    %v841 = vshrl.u32 %v840, 7
    %v842 = vsub.s32 %v52, %v841
    %v843 = vrot.slane %v720, %v842
    %v844 = vlaneseq
    %v845 = vshrl.u32 %v844, 7
    %v846 = vsub.s32 %v298, %v845
    %v847 = vrot.slane %v734, %v846
    %v848 = vsel %vm303, %v847, %v843
    %849 = vst.msk [vmem:[#allocation7 + $0x2] sm:$0x1] %vm305, %v848
    %s850 = scalar_lea.vmem [#allocation8], 32
    %851 = vst [vmem:[%s850] sm:$0xff] %v747
    %852 = vst [vmem:[%s850 + $0x8] sm:$0xff] %v748
    %v855 = vlaneseq
    %v856 = vshrl.u32 %v855, 7
    %v857 = vsub.s32 %v52, %v856
    %v858 = vrot.slane %v838, %v857
    %v859 = vlaneseq
    %v860 = vshrl.u32 %v859, 7
    %v861 = vsub.s32 %v298, %v860
    %v862 = vrot.slane %v839, %v861
    %v863 = vsel %vm303, %v862, %v858
    %865 = vst.msk [vmem:[#allocation11 + $0x2] sm:$0x1] %vm305, %v863
    %v866 = vadd.f32 %v596, %v822
    %v867 = vadd.f32 %v597, %v827
    %868 = vst [vmem:[#allocation10] sm:$0xff] %v866
    %869 = vst [vmem:[#allocation10 + $0x8] sm:$0xff] %v867
    // Predicated region
    $region22: #{tpu_custom_call.1} parent=1 // pred_check
      _
    $region23: #{tpu_custom_call.1} parent=1 // pred_check_branch
      %871 = sbr.rel (0) target = $region25
    $region24: #{tpu_custom_call.1} parent=1 // pred_region
      %s873 = ssub.s32 64, 64
      %874 = vsyncadd [#allocation4], %s873
      %s876 = sshll.u32 [#allocation7], 4
      %s877 = int_to_ptr.vmem [resolvable:$true] %s876
      %879 = dma.vmem_to_hbm [thread:$0]  %s877, 64, %s3, [#allocation4]
    $region25: #{tpu_custom_call.1} parent=1 // pred_fallthru
      _
    // Predicated region
    $region26: #{tpu_custom_call.1} parent=1 // pred_check
      _
    $region27: #{tpu_custom_call.1} parent=1 // pred_check_branch
      %881 = sbr.rel (0) target = $region29
    $region28: #{tpu_custom_call.1} parent=1 // pred_region
      %s883 = ssub.s32 768, 768
      %884 = vsyncadd [#allocation9], %s883
      %s885 = sshll.u32 [#allocation8], 4
      %s886 = int_to_ptr.vmem [resolvable:$true] %s885
      %891 = dma.vmem_to_hbm [thread:$0]  %s886, 768, %s4, [#allocation9], 128, 128, 8
    $region29: #{tpu_custom_call.1} parent=1 // pred_fallthru
      _
    // Predicated region
    $region30: #{tpu_custom_call.1} parent=1 // pred_check
      _
    $region31: #{tpu_custom_call.1} parent=1 // pred_check_branch
      %893 = sbr.rel (0) target = $region33
    $region32: #{tpu_custom_call.1} parent=1 // pred_region
      %s895 = ssub.s32 256, 256
      %896 = vsyncadd [#allocation9], %s895
      %s897 = sshll.u32 [#allocation10], 4
      %s898 = int_to_ptr.vmem [resolvable:$true] %s897
      %903 = dma.vmem_to_hbm [thread:$0]  %s898, 256, %s5, [#allocation9], 128, 128, 8
    $region33: #{tpu_custom_call.1} parent=1 // pred_fallthru
      _
    // Predicated region
    $region34: #{tpu_custom_call.1} parent=1 // pred_check
      _
    $region35: #{tpu_custom_call.1} parent=1 // pred_check_branch
      %905 = sbr.rel (0) target = $region37
    $region36: #{tpu_custom_call.1} parent=1 // pred_region
      %s907 = ssub.s32 64, 64
      %908 = vsyncadd [#allocation12], %s907
      %s910 = sshll.u32 [#allocation11], 4
      %s911 = int_to_ptr.vmem [resolvable:$true] %s910
      %913 = dma.vmem_to_hbm [thread:$0]  %s911, 64, %s6, [#allocation12]
    $region37: #{tpu_custom_call.1} parent=1 // pred_fallthru
      _
    // Predicated region
    $region38: #{tpu_custom_call.1} parent=1 // pred_check
      _
    $region39: #{tpu_custom_call.1} parent=1 // pred_check_branch
      %915 = sbr.rel (0) target = $region41
    $region40: #{tpu_custom_call.1} parent=1 // pred_region
      %916 = dma.done [#allocation4], 64
    $region41: #{tpu_custom_call.1} parent=1 // pred_fallthru
      _
    // Predicated region
    $region42: #{tpu_custom_call.1} parent=1 // pred_check
      _
    $region43: #{tpu_custom_call.1} parent=1 // pred_check_branch
      %918 = sbr.rel (0) target = $region45
    $region44: #{tpu_custom_call.1} parent=1 // pred_region
      %919 = dma.done [#allocation9], 768
    $region45: #{tpu_custom_call.1} parent=1 // pred_fallthru
      _
    // Predicated region
    $region46: #{tpu_custom_call.1} parent=1 // pred_check
      _
    $region47: #{tpu_custom_call.1} parent=1 // pred_check_branch
      %921 = sbr.rel (0) target = $region49
    $region48: #{tpu_custom_call.1} parent=1 // pred_region
      %922 = dma.done [#allocation9], 256
    $region49: #{tpu_custom_call.1} parent=1 // pred_fallthru
      _
    // Predicated region
    $region50: #{tpu_custom_call.1} parent=1 // pred_check
      _
    $region51: #{tpu_custom_call.1} parent=1 // pred_check_branch
      %924 = sbr.rel (0) target = $region53
    $region52: #{tpu_custom_call.1} parent=1 // pred_region
      %925 = dma.done [#allocation12], 64
    $region53: #{tpu_custom_call.1} parent=1 // pred_fallthru
      _
    %926 = vsyncpa [#allocation3], 1
    %927 = vsyncpa [#allocation6], 1
    %928 = vsyncpa [#allocation4], 1
    %929 = vsyncpa [#allocation9], 1
    %930 = vsyncpa [#allocation12], 1

// kernel: tpu_custom_call.1
$region0: #{tpu_custom_call.1}
  #allocation0 [shape = 'u32[]', space=smem, size = 0x4, offset = 0x4, fixed_abs, tag = 'smem constant byte address 0x4 - core index']
  #allocation1 [shape = 'u32[144,128]{1,0:T(1,128)}', space=vmem, size = 0x12000, scoped, tag = 'internal scratch']
  %s0 = inlined_call_operand.hbm [shape: f32[16,128], index: 0, kind: input, shape index: {}]
  %s1 = inlined_call_operand.hbm [shape: f32[3,128,128], index: 1, kind: input, shape index: {}]
  %s2 = inlined_call_operand.vmem [shape: f32[3,128], index: 2, kind: input, shape index: {}]
  %s3 = inlined_call_operand.hbm [shape: s32[3,16], index: 3, kind: output, shape index: {0}]
  %s4 = inlined_call_operand.hbm [shape: f32[3,16,128], index: 4, kind: output, shape index: {1}]
  %s5 = inlined_call_operand.hbm [shape: f32[16,128], index: 5, kind: output, shape index: {2}]
  %s6 = inlined_call_operand.hbm [shape: f32[3,16], index: 6, kind: output, shape index: {3}]
  %7 = xla_tuple %s3, %s4, %s5, %s6
  %s8 = sld [smem:[#allocation0]]
  $region54: #{tpu_custom_call.1} parent=0
    _
  %s10 = ssub.s32 1, %s8
  %s11 = scalar_select 0, %s10, %s8
  $region1: #{tpu_custom_call.1} parent=0
    #allocation2 [shape = 'u8[8192]{0}', space=vmem, size = 0x2000, scoped, tag = 'input window, operand 0, single buffered']
    #allocation3 [shape = 's32[1]{0}', space=sflag, size = 0x4, scoped, tag = 'scoped memory for tpu_custom_call.1']
    #allocation4 [shape = 's32[1]{0}', space=sflag, size = 0x4, scoped, tag = 'scoped memory for tpu_custom_call.1']
    #allocation5 [shape = 'u8[196608]{0}', space=vmem, size = 0x30000, scoped, tag = 'input window, operand 1, single buffered']
    #allocation6 [shape = 's32[1]{0}', space=sflag, size = 0x4, scoped, tag = 'scoped memory for tpu_custom_call.1']
    #allocation7 [shape = 'u8[2048]{0}', space=vmem, size = 0x800, scoped, tag = 'output window, operand 0, single buffered']
    #allocation8 [shape = 'u8[24576]{0}', space=vmem, size = 0x6000, scoped, tag = 'output window, operand 1, single buffered']
    #allocation9 [shape = 's32[1]{0}', space=sflag, size = 0x4, scoped, tag = 'scoped memory for tpu_custom_call.1']
    #allocation10 [shape = 'u8[8192]{0}', space=vmem, size = 0x2000, scoped, tag = 'output window, operand 2, single buffered']
    #allocation11 [shape = 'u8[2048]{0}', space=vmem, size = 0x800, scoped, tag = 'output window, operand 3, single buffered']
    #allocation12 [shape = 's32[1]{0}', space=sflag, size = 0x4, scoped, tag = 'scoped memory for tpu_custom_call.1']
    %12 = vsyncpa [#allocation3], 0
    %13 = vsyncpa [#allocation6], 0
    %14 = vsyncpa [#allocation4], 0
    %15 = vsyncpa [#allocation9], 0
    %16 = vsyncpa [#allocation12], 0
    // Predicated region
    $region2: #{tpu_custom_call.1} parent=1 // pred_check
      _
    $region3: #{tpu_custom_call.1} parent=1 // pred_check_branch
      %18 = sbr.rel (0) target = $region5
    $region4: #{tpu_custom_call.1} parent=1 // pred_region
      %s20 = ssub.s32 256, 256
      %21 = vsyncadd [#allocation3], %s20
      %s22 = sshll.u32 [#allocation2], 4
      %s23 = int_to_ptr.vmem [resolvable:$true] %s22
      %28 = dma.hbm_to_vmem [thread:$0]  %s0, 256, %s23, [#allocation3], 128, 128, 8
    $region5: #{tpu_custom_call.1} parent=1 // pred_fallthru
      _
    // Predicated region
    $region6: #{tpu_custom_call.1} parent=1 // pred_check
      _
    $region7: #{tpu_custom_call.1} parent=1 // pred_check_branch
      %30 = sbr.rel (0) target = $region9
    $region8: #{tpu_custom_call.1} parent=1 // pred_region
      %s32 = ssub.s32 6144, 6144
      %33 = vsyncadd [#allocation6], %s32
      %s34 = sshll.u32 [#allocation5], 4
      %s35 = int_to_ptr.vmem [resolvable:$true] %s34
      %40 = dma.hbm_to_vmem [thread:$0]  %s1, 6144, %s35, [#allocation6], 128, 128, 8
    $region9: #{tpu_custom_call.1} parent=1 // pred_fallthru
      _
    // Predicated region
    $region10: #{tpu_custom_call.1} parent=1 // pred_check
      _
    $region11: #{tpu_custom_call.1} parent=1 // pred_check_branch
      %42 = sbr.rel (0) target = $region13
    $region12: #{tpu_custom_call.1} parent=1 // pred_region
      _
    $region13: #{tpu_custom_call.1} parent=1 // pred_fallthru
      _
    // Predicated region
    $region14: #{tpu_custom_call.1} parent=1 // pred_check
      _
    $region15: #{tpu_custom_call.1} parent=1 // pred_check_branch
      %44 = sbr.rel (0) target = $region17
    $region16: #{tpu_custom_call.1} parent=1 // pred_region
      %45 = dma.done [#allocation3], 256
    $region17: #{tpu_custom_call.1} parent=1 // pred_fallthru
      _
    // Predicated region
    $region18: #{tpu_custom_call.1} parent=1 // pred_check
      _
    $region19: #{tpu_custom_call.1} parent=1 // pred_check_branch
      %47 = sbr.rel (0) target = $region21
    $region20: #{tpu_custom_call.1} parent=1 // pred_region
      %48 = dma.done [#allocation6], 6144
    $region21: #{tpu_custom_call.1} parent=1 // pred_fallthru
      _
    %v49 = vld [vmem:[#allocation2] sm:$0xff]
    %v50 = vld [vmem:[#allocation2 + $0x8] sm:$0xff]
    %v51 = vlaneseq
    %v52 = vand.u32 %v51, 127
    %v53 = vld [vmem:[#allocation5] sm:$0xff]
    %v54 = vld [vmem:[#allocation5 + $0x8] sm:$0xff]
    %v55 = vld [vmem:[#allocation5 + $0x10] sm:$0xff]
    %v56 = vld [vmem:[#allocation5 + $0x18] sm:$0xff]
    %v57 = vld [vmem:[#allocation5 + $0x20] sm:$0xff]
    %v58 = vld [vmem:[#allocation5 + $0x28] sm:$0xff]
    %v59 = vld [vmem:[#allocation5 + $0x30] sm:$0xff]
    %v60 = vld [vmem:[#allocation5 + $0x38] sm:$0xff]
    %v61 = vld [vmem:[#allocation5 + $0x40] sm:$0xff]
    %v62 = vld [vmem:[#allocation5 + $0x48] sm:$0xff]
    %v63 = vld [vmem:[#allocation5 + $0x50] sm:$0xff]
    %v64 = vld [vmem:[#allocation5 + $0x58] sm:$0xff]
    %v65 = vld [vmem:[#allocation5 + $0x60] sm:$0xff]
    %v66 = vld [vmem:[#allocation5 + $0x68] sm:$0xff]
    %v67 = vld [vmem:[#allocation5 + $0x70] sm:$0xff]
    %v68 = vld [vmem:[#allocation5 + $0x78] sm:$0xff]
    %v69 = vld [vmem:[%s2] sm:$0x1]
    %70 = vmatprep.subr.mxu0 0.0
    %71 = vmatpush1.xpose.msra.mxu0 %v53
    %72 = vmatprep.subr.mxu0 0.0
    %73 = vmatpush1.xpose.msra.mxu0 %v54
    %74 = vmatprep.subr.mxu0 0.0
    %75 = vmatpush1.xpose.msra.mxu0 %v55
    %76 = vmatprep.subr.mxu0 0.0
    %77 = vmatpush1.xpose.msra.mxu0 %v56
    %78 = vmatprep.subr.mxu0 0.0
    %79 = vmatpush1.xpose.msra.mxu0 %v57
    %80 = vmatprep.subr.mxu0 0.0
    %81 = vmatpush1.xpose.msra.mxu0 %v58
    %82 = vmatprep.subr.mxu0 0.0
    %83 = vmatpush1.xpose.msra.mxu0 %v59
    %84 = vmatprep.subr.mxu0 0.0
    %85 = vmatpush1.xpose.msra.mxu0 %v60
    %86 = vmatprep.subr.mxu0 0.0
    %87 = vmatpush1.xpose.msra.mxu0 %v61
    %88 = vmatprep.subr.mxu0 0.0
    %89 = vmatpush1.xpose.msra.mxu0 %v62
    %90 = vmatprep.subr.mxu0 0.0
    %91 = vmatpush1.xpose.msra.mxu0 %v63
    %92 = vmatprep.subr.mxu0 0.0
    %93 = vmatpush1.xpose.msra.mxu0 %v64
    %94 = vmatprep.subr.mxu0 0.0
    %95 = vmatpush1.xpose.msra.mxu0 %v65
    %96 = vmatprep.subr.mxu0 0.0
    %97 = vmatpush1.xpose.msra.mxu0 %v66
    %98 = vmatprep.subr.mxu0 0.0
    %99 = vmatpush1.xpose.msra.mxu0 %v67
    %100 = vmatprep.subr.mxu0 0.0
    %101 = vmatpush1.xpose.msra.mxu0 %v68
    %102 = vmatprep.subr.mxu0 0.0
    %103 = vmatpush1.xpose.msra.mxu0 0.0
    %104 = vmatprep.subr.mxu0 0.0
    %105 = vmatpush1.xpose.msra.mxu0 0.0
    %106 = vmatprep.subr.mxu0 0.0
    %107 = vmatpush1.xpose.msra.mxu0 0.0
    %108 = vmatprep.subr.mxu0 0.0
    %109 = vmatpush1.xpose.msra.mxu0 0.0
    %110 = vmatprep.subr.mxu0 0.0
    %111 = vmatpush1.xpose.msra.mxu0 0.0
    %112 = vmatprep.subr.mxu0 0.0
    %113 = vmatpush1.xpose.msra.mxu0 0.0
    %114 = vmatprep.subr.mxu0 0.0
    %115 = vmatpush1.xpose.msra.mxu0 0.0
    %116 = vmatprep.subr.mxu0 0.0
    %117 = vmatpush1.xpose.msra.mxu0 0.0
    %118 = vmatprep.subr.mxu0 0.0
    %119 = vmatpush1.xpose.msra.mxu0 0.0
    %120 = vmatprep.subr.mxu0 0.0
    %121 = vmatpush1.xpose.msra.mxu0 0.0
    %122 = vmatprep.subr.mxu0 0.0
    %123 = vmatpush1.xpose.msra.mxu0 0.0
    %124 = vmatprep.subr.mxu0 0.0
    %125 = vmatpush1.xpose.msra.mxu0 0.0
    %126 = vmatprep.subr.mxu0 0.0
    %127 = vmatpush1.xpose.msra.mxu0 0.0
    %128 = vmatprep.subr.mxu0 0.0
    %129 = vmatpush1.xpose.msra.mxu0 0.0
    %130 = vmatprep.subr.mxu0 0.0
    %131 = vmatpush1.xpose.msra.mxu0 0.0
    %132 = vmatprep.subr.mxu0 0.0
    %133 = vmatpush1.xpose.msra.mxu0 0.0
    %134 = vmatprep.mubr.f32.mxu0 0.0
    %135 = vmatmul.mubr.f32.gmra.mrb[0].mxu0 %v49
    %v136 = vpop.f32.mrb[0].mxu0
    %v137 = vadd.f32 0.0, %v136
    %v138 = vpop.f32.mrb[0].mxu0
    %139 = vmatprep.mubr.f32.mxu0 0.0
    %140 = vmatmul.mubr.f32.gmra.mrb[0].mxu0 %v50
    %v141 = vpop.f32.mrb[0].mxu0
    %v142 = vadd.f32 0.0, %v141
    %v143 = vpop.f32.mrb[0].mxu0
    %144 = vdwg.mxu0
    %v145 = vmul.f32 %v137, 2.0
    %v146 = vmul.f32 %v142, 2.0
    %v147 = vlaneseq
    %v148 = vshrl.u32 %v147, 7
    %v149 = vsub.s32 0, %v148
    %v150 = vrot.slane %v69, %v149
    %v151 = vsub.f32 %v150, %v145
    %v152 = vsub.f32 %v150, %v146
    %153 = vmin.xlane.f32.xlu0 %v151
    %v154 = vpop.xlane.xlu0 %153
    %155 = vmin.xlane.f32.xlu0 %v152
    %v156 = vpop.xlane.xlu0 %155
    %vm157 = vcmp.eq.f32.partialorder %v151, %v154
    %vm158 = vcmp.eq.f32.partialorder %v152, %v156
    %v159 = vsel %vm157, %v52, 128
    %v160 = vsel %vm158, %v52, 128
    %v161 = vand.u32 %v159, 65535
    %v162 = vshra.s32 %v159, 16
    %v163 = vcvt.s32.f32 %v161
    %v164 = vcvt.s32.f32 %v162
    %165 = vmin.xlane.f32.xlu0 %v164
    %v166 = vpop.xlane.xlu0 %165
    %vm167 = vcmp.eq.f32.partialorder %v164, %v166
    %v168 = vsel %vm167, %v163, inf
    %169 = vmin.xlane.f32.xlu0 %v168
    %v170 = vpop.xlane.xlu0 %169
    %v171 = vcvt.f32.s32 %v170
    %v172 = vcvt.f32.s32 %v166
    %v173 = vshll.u32 %v172, 16
    %v174 = vadd.s32 %v173, %v171
    %v175 = vand.u32 %v160, 65535
    %v176 = vshra.s32 %v160, 16
    %v177 = vcvt.s32.f32 %v175
    %v178 = vcvt.s32.f32 %v176
    %179 = vmin.xlane.f32.xlu0 %v178
    %v180 = vpop.xlane.xlu0 %179
    %vm181 = vcmp.eq.f32.partialorder %v178, %v180
    %v182 = vsel %vm181, %v177, inf
    %183 = vmin.xlane.f32.xlu0 %v182
    %v184 = vpop.xlane.xlu0 %183
    %v185 = vcvt.f32.s32 %v184
    %v186 = vcvt.f32.s32 %v180
    %v187 = vshll.u32 %v186, 16
    %v188 = vadd.s32 %v187, %v185
    %v189 = vsub.f32 %v154, %v151
    %v190 = vsub.f32 %v156, %v152
    %v191 = vmul.f32 %v189, 1.442695
    %v192 = vpow.pop %v191
    %v193 = vmul.f32 %v190, 1.442695
    %v194 = vpow.pop %v193
    %195 = vadd.xlane.f32.xlu0 %v192
    %v196 = vpop.xlane.xlu0 %195
    %197 = vadd.xlane.f32.xlu0 %v194
    %v198 = vpop.xlane.xlu0 %197
    %v199 = vrcp.pop %v196
    %v200 = vrcp.pop %v198
    %v201 = vmul.f32 %v192, %v199
    %v202 = vmul.f32 %v194, %v200
    %vm203 = vcmp.eq.s32.totalorder %v52, %v174
    %vm204 = vcmp.eq.s32.totalorder %v52, %v188
    %v205 = vsel %vm203, 1, 0
    %v206 = vsel %vm204, 1, 0
    %v207 = vcvt.s32.f32 %v205
    %v208 = vcvt.s32.f32 %v206
    %209 = vmatprep.subr.mxu0 0.0
    %210 = vmatpush1.msra.mxu0 %v53
    %211 = vmatprep.subr.mxu0 0.0
    %212 = vmatpush1.msra.mxu0 %v54
    %213 = vmatprep.subr.mxu0 0.0
    %214 = vmatpush1.msra.mxu0 %v55
    %215 = vmatprep.subr.mxu0 0.0
    %216 = vmatpush1.msra.mxu0 %v56
    %217 = vmatprep.subr.mxu0 0.0
    %218 = vmatpush1.msra.mxu0 %v57
    %219 = vmatprep.subr.mxu0 0.0
    %220 = vmatpush1.msra.mxu0 %v58
    %221 = vmatprep.subr.mxu0 0.0
    %222 = vmatpush1.msra.mxu0 %v59
    %223 = vmatprep.subr.mxu0 0.0
    %224 = vmatpush1.msra.mxu0 %v60
    %225 = vmatprep.subr.mxu0 0.0
    %226 = vmatpush1.msra.mxu0 %v61
    %227 = vmatprep.subr.mxu0 0.0
    %228 = vmatpush1.msra.mxu0 %v62
    %229 = vmatprep.subr.mxu0 0.0
    %230 = vmatpush1.msra.mxu0 %v63
    %231 = vmatprep.subr.mxu0 0.0
    %232 = vmatpush1.msra.mxu0 %v64
    %233 = vmatprep.subr.mxu0 0.0
    %234 = vmatpush1.msra.mxu0 %v65
    %235 = vmatprep.subr.mxu0 0.0
    %236 = vmatpush1.msra.mxu0 %v66
    %237 = vmatprep.subr.mxu0 0.0
    %238 = vmatpush1.msra.mxu0 %v67
    %239 = vmatprep.subr.mxu0 0.0
    %240 = vmatpush1.msra.mxu0 %v68
    %241 = vmatprep.subr.mxu0 0.0
    %242 = vmatpush1.msra.mxu0 0.0
    %243 = vmatprep.subr.mxu0 0.0
    %244 = vmatpush1.msra.mxu0 0.0
    %245 = vmatprep.subr.mxu0 0.0
    %246 = vmatpush1.msra.mxu0 0.0
    %247 = vmatprep.subr.mxu0 0.0
    %248 = vmatpush1.msra.mxu0 0.0
    %249 = vmatprep.subr.mxu0 0.0
    %250 = vmatpush1.msra.mxu0 0.0
    %251 = vmatprep.subr.mxu0 0.0
    %252 = vmatpush1.msra.mxu0 0.0
    %253 = vmatprep.subr.mxu0 0.0
    %254 = vmatpush1.msra.mxu0 0.0
    %255 = vmatprep.subr.mxu0 0.0
    %256 = vmatpush1.msra.mxu0 0.0
    %257 = vmatprep.subr.mxu0 0.0
    %258 = vmatpush1.msra.mxu0 0.0
    %259 = vmatprep.subr.mxu0 0.0
    %260 = vmatpush1.msra.mxu0 0.0
    %261 = vmatprep.subr.mxu0 0.0
    %262 = vmatpush1.msra.mxu0 0.0
    %263 = vmatprep.subr.mxu0 0.0
    %264 = vmatpush1.msra.mxu0 0.0
    %265 = vmatprep.subr.mxu0 0.0
    %266 = vmatpush1.msra.mxu0 0.0
    %267 = vmatprep.subr.mxu0 0.0
    %268 = vmatpush1.msra.mxu0 0.0
    %269 = vmatprep.subr.mxu0 0.0
    %270 = vmatpush1.msra.mxu0 0.0
    %271 = vmatprep.subr.mxu0 0.0
    %272 = vmatpush1.msra.mxu0 0.0
    %273 = vmatprep.mubr.f32.mxu0 0.0
    %274 = vmatmul.mubr.f32.gmra.mrb[0].mxu0 %v207
    %v275 = vpop.f32.mrb[0].mxu0
    %v276 = vadd.f32 0.0, %v275
    %v277 = vpop.f32.mrb[0].mxu0
    %278 = vmatprep.mubr.f32.mxu0 0.0
    %279 = vmatmul.mubr.f32.gmra.mrb[0].mxu0 %v208
    %v280 = vpop.f32.mrb[0].mxu0
    %v281 = vadd.f32 0.0, %v280
    %v282 = vpop.f32.mrb[0].mxu0
    %283 = vdwg.mxu0
    %v284 = vmul.f32 %v49, %v49
    %v285 = vmul.f32 %v50, %v50
    %286 = vadd.xlane.f32.xlu0 %v284
    %v287 = vpop.xlane.xlu0 %286
    %288 = vadd.xlane.f32.xlu0 %v285
    %v289 = vpop.xlane.xlu0 %288
    %v290 = vadd.f32 %v154, %v287
    %v291 = vadd.f32 %v156, %v289
    %v292 = vmul.f32 %v290, 0.0315625
    %v293 = vmul.f32 %v291, 0.0315625
    %v294 = vlaneseq
    %v295 = vshrl.u32 %v294, 7
    %v296 = vsub.s32 %v52, %v295
    %v297 = vrot.slane %v174, %v296
    %v298 = vadd.s32 %v52, 4294967288
    %v299 = vlaneseq
    %v300 = vshrl.u32 %v299, 7
    %v301 = vsub.s32 %v298, %v300
    %v302 = vrot.slane %v188, %v301
    %vm303 = vcmask 130112
    %v304 = vsel %vm303, %v302, %v297
    %vm305 = vcmask 122880
    %306 = vst.msk [vmem:[#allocation7] sm:$0x1] %vm305, %v304
    %307 = vst [vmem:[#allocation8] sm:$0xff] %v201
    %308 = vst [vmem:[#allocation8 + $0x8] sm:$0xff] %v202
    %v311 = vlaneseq
    %v312 = vshrl.u32 %v311, 7
    %v313 = vsub.s32 %v52, %v312
    %v314 = vrot.slane %v292, %v313
    %v315 = vlaneseq
    %v316 = vshrl.u32 %v315, 7
    %v317 = vsub.s32 %v298, %v316
    %v318 = vrot.slane %v293, %v317
    %v319 = vsel %vm303, %v318, %v314
    %321 = vst.msk [vmem:[#allocation11] sm:$0x1] %vm305, %v319
    %v322 = vsub.f32 %v49, %v276
    %v323 = vsub.f32 %v50, %v281
    %v324 = vadd.f32 %v276, 0.0
    %v325 = vadd.f32 %v281, 0.0
    %s326 = scalar_lea.vmem [#allocation5], 128
    %v327 = vld [vmem:[%s326] sm:$0xff]
    %v328 = vld [vmem:[%s326 + $0x8] sm:$0xff]
    %v329 = vld [vmem:[%s326 + $0x10] sm:$0xff]
    %v330 = vld [vmem:[%s326 + $0x18] sm:$0xff]
    %v331 = vld [vmem:[%s326 + $0x20] sm:$0xff]
    %v332 = vld [vmem:[%s326 + $0x28] sm:$0xff]
    %v333 = vld [vmem:[%s326 + $0x30] sm:$0xff]
    %v334 = vld [vmem:[%s326 + $0x38] sm:$0xff]
    %v335 = vld [vmem:[%s326 + $0x40] sm:$0xff]
    %v336 = vld [vmem:[%s326 + $0x48] sm:$0xff]
    %v337 = vld [vmem:[%s326 + $0x50] sm:$0xff]
    %v338 = vld [vmem:[%s326 + $0x58] sm:$0xff]
    %v339 = vld [vmem:[%s326 + $0x60] sm:$0xff]
    %v340 = vld [vmem:[%s326 + $0x68] sm:$0xff]
    %v341 = vld [vmem:[%s326 + $0x70] sm:$0xff]
    %v342 = vld [vmem:[%s326 + $0x78] sm:$0xff]
    %v343 = vld [vmem:[%s2 + $0x1] sm:$0x1]
    %344 = vmatprep.subr.mxu0 0.0
    %345 = vmatpush1.xpose.msra.mxu0 %v327
    %346 = vmatprep.subr.mxu0 0.0
    %347 = vmatpush1.xpose.msra.mxu0 %v328
    %348 = vmatprep.subr.mxu0 0.0
    %349 = vmatpush1.xpose.msra.mxu0 %v329
    %350 = vmatprep.subr.mxu0 0.0
    %351 = vmatpush1.xpose.msra.mxu0 %v330
    %352 = vmatprep.subr.mxu0 0.0
    %353 = vmatpush1.xpose.msra.mxu0 %v331
    %354 = vmatprep.subr.mxu0 0.0
    %355 = vmatpush1.xpose.msra.mxu0 %v332
    %356 = vmatprep.subr.mxu0 0.0
    %357 = vmatpush1.xpose.msra.mxu0 %v333
    %358 = vmatprep.subr.mxu0 0.0
    %359 = vmatpush1.xpose.msra.mxu0 %v334
    %360 = vmatprep.subr.mxu0 0.0
    %361 = vmatpush1.xpose.msra.mxu0 %v335
    %362 = vmatprep.subr.mxu0 0.0
    %363 = vmatpush1.xpose.msra.mxu0 %v336
    %364 = vmatprep.subr.mxu0 0.0
    %365 = vmatpush1.xpose.msra.mxu0 %v337
    %366 = vmatprep.subr.mxu0 0.0
    %367 = vmatpush1.xpose.msra.mxu0 %v338
    %368 = vmatprep.subr.mxu0 0.0
    %369 = vmatpush1.xpose.msra.mxu0 %v339
    %370 = vmatprep.subr.mxu0 0.0
    %371 = vmatpush1.xpose.msra.mxu0 %v340
    %372 = vmatprep.subr.mxu0 0.0
    %373 = vmatpush1.xpose.msra.mxu0 %v341
    %374 = vmatprep.subr.mxu0 0.0
    %375 = vmatpush1.xpose.msra.mxu0 %v342
    %376 = vmatprep.subr.mxu0 0.0
    %377 = vmatpush1.xpose.msra.mxu0 0.0
    %378 = vmatprep.subr.mxu0 0.0
    %379 = vmatpush1.xpose.msra.mxu0 0.0
    %380 = vmatprep.subr.mxu0 0.0
    %381 = vmatpush1.xpose.msra.mxu0 0.0
    %382 = vmatprep.subr.mxu0 0.0
    %383 = vmatpush1.xpose.msra.mxu0 0.0
    %384 = vmatprep.subr.mxu0 0.0
    %385 = vmatpush1.xpose.msra.mxu0 0.0
    %386 = vmatprep.subr.mxu0 0.0
    %387 = vmatpush1.xpose.msra.mxu0 0.0
    %388 = vmatprep.subr.mxu0 0.0
    %389 = vmatpush1.xpose.msra.mxu0 0.0
    %390 = vmatprep.subr.mxu0 0.0
    %391 = vmatpush1.xpose.msra.mxu0 0.0
    %392 = vmatprep.subr.mxu0 0.0
    %393 = vmatpush1.xpose.msra.mxu0 0.0
    %394 = vmatprep.subr.mxu0 0.0
    %395 = vmatpush1.xpose.msra.mxu0 0.0
    %396 = vmatprep.subr.mxu0 0.0
    %397 = vmatpush1.xpose.msra.mxu0 0.0
    %398 = vmatprep.subr.mxu0 0.0
    %399 = vmatpush1.xpose.msra.mxu0 0.0
    %400 = vmatprep.subr.mxu0 0.0
    %401 = vmatpush1.xpose.msra.mxu0 0.0
    %402 = vmatprep.subr.mxu0 0.0
    %403 = vmatpush1.xpose.msra.mxu0 0.0
    %404 = vmatprep.subr.mxu0 0.0
    %405 = vmatpush1.xpose.msra.mxu0 0.0
    %406 = vmatprep.subr.mxu0 0.0
    %407 = vmatpush1.xpose.msra.mxu0 0.0
    %408 = vmatprep.mubr.f32.mxu0 0.0
    %409 = vmatmul.mubr.f32.gmra.mrb[0].mxu0 %v322
    %v410 = vpop.f32.mrb[0].mxu0
    %v411 = vadd.f32 0.0, %v410
    %v412 = vpop.f32.mrb[0].mxu0
    %413 = vmatprep.mubr.f32.mxu0 0.0
    %414 = vmatmul.mubr.f32.gmra.mrb[0].mxu0 %v323
    %v415 = vpop.f32.mrb[0].mxu0
    %v416 = vadd.f32 0.0, %v415
    %v417 = vpop.f32.mrb[0].mxu0
    %418 = vdwg.mxu0
    %v419 = vmul.f32 %v411, 2.0
    %v420 = vmul.f32 %v416, 2.0
    %v421 = vlaneseq
    %v422 = vshrl.u32 %v421, 7
    %v423 = vsub.s32 0, %v422
    %v424 = vrot.slane %v343, %v423
    %v425 = vsub.f32 %v424, %v419
    %v426 = vsub.f32 %v424, %v420
    %427 = vmin.xlane.f32.xlu0 %v425
    %v428 = vpop.xlane.xlu0 %427
    %429 = vmin.xlane.f32.xlu0 %v426
    %v430 = vpop.xlane.xlu0 %429
    %vm431 = vcmp.eq.f32.partialorder %v425, %v428
    %vm432 = vcmp.eq.f32.partialorder %v426, %v430
    %v433 = vsel %vm431, %v52, 128
    %v434 = vsel %vm432, %v52, 128
    %v435 = vand.u32 %v433, 65535
    %v436 = vshra.s32 %v433, 16
    %v437 = vcvt.s32.f32 %v435
    %v438 = vcvt.s32.f32 %v436
    %439 = vmin.xlane.f32.xlu0 %v438
    %v440 = vpop.xlane.xlu0 %439
    %vm441 = vcmp.eq.f32.partialorder %v438, %v440
    %v442 = vsel %vm441, %v437, inf
    %443 = vmin.xlane.f32.xlu0 %v442
    %v444 = vpop.xlane.xlu0 %443
    %v445 = vcvt.f32.s32 %v444
    %v446 = vcvt.f32.s32 %v440
    %v447 = vshll.u32 %v446, 16
    %v448 = vadd.s32 %v447, %v445
    %v449 = vand.u32 %v434, 65535
    %v450 = vshra.s32 %v434, 16
    %v451 = vcvt.s32.f32 %v449
    %v452 = vcvt.s32.f32 %v450
    %453 = vmin.xlane.f32.xlu0 %v452
    %v454 = vpop.xlane.xlu0 %453
    %vm455 = vcmp.eq.f32.partialorder %v452, %v454
    %v456 = vsel %vm455, %v451, inf
    %457 = vmin.xlane.f32.xlu0 %v456
    %v458 = vpop.xlane.xlu0 %457
    %v459 = vcvt.f32.s32 %v458
    %v460 = vcvt.f32.s32 %v454
    %v461 = vshll.u32 %v460, 16
    %v462 = vadd.s32 %v461, %v459
    %v463 = vsub.f32 %v428, %v425
    %v464 = vsub.f32 %v430, %v426
    %v465 = vmul.f32 %v463, 1.442695
    %v466 = vpow.pop %v465
    %v467 = vmul.f32 %v464, 1.442695
    %v468 = vpow.pop %v467
    %469 = vadd.xlane.f32.xlu0 %v466
    %v470 = vpop.xlane.xlu0 %469
    %471 = vadd.xlane.f32.xlu0 %v468
    %v472 = vpop.xlane.xlu0 %471
    %v473 = vrcp.pop %v470
    %v474 = vrcp.pop %v472
    %v475 = vmul.f32 %v466, %v473
    %v476 = vmul.f32 %v468, %v474
    %vm477 = vcmp.eq.s32.totalorder %v52, %v448
    %vm478 = vcmp.eq.s32.totalorder %v52, %v462
    %v479 = vsel %vm477, 1, 0
    %v480 = vsel %vm478, 1, 0
    %v481 = vcvt.s32.f32 %v479
    %v482 = vcvt.s32.f32 %v480
    %483 = vmatprep.subr.mxu0 0.0
    %484 = vmatpush1.msra.mxu0 %v327
    %485 = vmatprep.subr.mxu0 0.0
    %486 = vmatpush1.msra.mxu0 %v328
    %487 = vmatprep.subr.mxu0 0.0
    %488 = vmatpush1.msra.mxu0 %v329
    %489 = vmatprep.subr.mxu0 0.0
    %490 = vmatpush1.msra.mxu0 %v330
    %491 = vmatprep.subr.mxu0 0.0
    %492 = vmatpush1.msra.mxu0 %v331
    %493 = vmatprep.subr.mxu0 0.0
    %494 = vmatpush1.msra.mxu0 %v332
    %495 = vmatprep.subr.mxu0 0.0
    %496 = vmatpush1.msra.mxu0 %v333
    %497 = vmatprep.subr.mxu0 0.0
    %498 = vmatpush1.msra.mxu0 %v334
    %499 = vmatprep.subr.mxu0 0.0
    %500 = vmatpush1.msra.mxu0 %v335
    %501 = vmatprep.subr.mxu0 0.0
    %502 = vmatpush1.msra.mxu0 %v336
    %503 = vmatprep.subr.mxu0 0.0
    %504 = vmatpush1.msra.mxu0 %v337
    %505 = vmatprep.subr.mxu0 0.0
    %506 = vmatpush1.msra.mxu0 %v338
    %507 = vmatprep.subr.mxu0 0.0
    %508 = vmatpush1.msra.mxu0 %v339
    %509 = vmatprep.subr.mxu0 0.0
    %510 = vmatpush1.msra.mxu0 %v340
    %511 = vmatprep.subr.mxu0 0.0
    %512 = vmatpush1.msra.mxu0 %v341
    %513 = vmatprep.subr.mxu0 0.0
    %514 = vmatpush1.msra.mxu0 %v342
    %515 = vmatprep.subr.mxu0 0.0
    %516 = vmatpush1.msra.mxu0 0.0
    %517 = vmatprep.subr.mxu0 0.0
    %518 = vmatpush1.msra.mxu0 0.0
    %519 = vmatprep.subr.mxu0 0.0
    %520 = vmatpush1.msra.mxu0 0.0
    %521 = vmatprep.subr.mxu0 0.0
    %522 = vmatpush1.msra.mxu0 0.0
    %523 = vmatprep.subr.mxu0 0.0
    %524 = vmatpush1.msra.mxu0 0.0
    %525 = vmatprep.subr.mxu0 0.0
    %526 = vmatpush1.msra.mxu0 0.0
    %527 = vmatprep.subr.mxu0 0.0
    %528 = vmatpush1.msra.mxu0 0.0
    %529 = vmatprep.subr.mxu0 0.0
    %530 = vmatpush1.msra.mxu0 0.0
    %531 = vmatprep.subr.mxu0 0.0
    %532 = vmatpush1.msra.mxu0 0.0
    %533 = vmatprep.subr.mxu0 0.0
    %534 = vmatpush1.msra.mxu0 0.0
    %535 = vmatprep.subr.mxu0 0.0
    %536 = vmatpush1.msra.mxu0 0.0
    %537 = vmatprep.subr.mxu0 0.0
    %538 = vmatpush1.msra.mxu0 0.0
    %539 = vmatprep.subr.mxu0 0.0
    %540 = vmatpush1.msra.mxu0 0.0
    %541 = vmatprep.subr.mxu0 0.0
    %542 = vmatpush1.msra.mxu0 0.0
    %543 = vmatprep.subr.mxu0 0.0
    %544 = vmatpush1.msra.mxu0 0.0
    %545 = vmatprep.subr.mxu0 0.0
    %546 = vmatpush1.msra.mxu0 0.0
    %547 = vmatprep.mubr.f32.mxu0 0.0
    %548 = vmatmul.mubr.f32.gmra.mrb[0].mxu0 %v481
    %v549 = vpop.f32.mrb[0].mxu0
    %v550 = vadd.f32 0.0, %v549
    %v551 = vpop.f32.mrb[0].mxu0
    %552 = vmatprep.mubr.f32.mxu0 0.0
    %553 = vmatmul.mubr.f32.gmra.mrb[0].mxu0 %v482
    %v554 = vpop.f32.mrb[0].mxu0
    %v555 = vadd.f32 0.0, %v554
    %v556 = vpop.f32.mrb[0].mxu0
    %557 = vdwg.mxu0
    %v558 = vmul.f32 %v322, %v322
    %v559 = vmul.f32 %v323, %v323
    %560 = vadd.xlane.f32.xlu0 %v558
    %v561 = vpop.xlane.xlu0 %560
    %562 = vadd.xlane.f32.xlu0 %v559
    %v563 = vpop.xlane.xlu0 %562
    %v564 = vadd.f32 %v428, %v561
    %v565 = vadd.f32 %v430, %v563
    %v566 = vmul.f32 %v564, 0.0315625
    %v567 = vmul.f32 %v565, 0.0315625
    %v568 = vlaneseq
    %v569 = vshrl.u32 %v568, 7
    %v570 = vsub.s32 %v52, %v569
    %v571 = vrot.slane %v448, %v570
    %v572 = vlaneseq
    %v573 = vshrl.u32 %v572, 7
    %v574 = vsub.s32 %v298, %v573
    %v575 = vrot.slane %v462, %v574
    %v576 = vsel %vm303, %v575, %v571
    %577 = vst.msk [vmem:[#allocation7 + $0x1] sm:$0x1] %vm305, %v576
    %s578 = scalar_lea.vmem [#allocation8], 16
    %579 = vst [vmem:[%s578] sm:$0xff] %v475
    %580 = vst [vmem:[%s578 + $0x8] sm:$0xff] %v476
    %v583 = vlaneseq
    %v584 = vshrl.u32 %v583, 7
    %v585 = vsub.s32 %v52, %v584
    %v586 = vrot.slane %v566, %v585
    %v587 = vlaneseq
    %v588 = vshrl.u32 %v587, 7
    %v589 = vsub.s32 %v298, %v588
    %v590 = vrot.slane %v567, %v589
    %v591 = vsel %vm303, %v590, %v586
    %593 = vst.msk [vmem:[#allocation11 + $0x1] sm:$0x1] %vm305, %v591
    %v594 = vsub.f32 %v322, %v550
    %v595 = vsub.f32 %v323, %v555
    %v596 = vadd.f32 %v324, %v550
    %v597 = vadd.f32 %v325, %v555
    %s598 = scalar_lea.vmem [#allocation5], 256
    %v599 = vld [vmem:[%s598] sm:$0xff]
    %v600 = vld [vmem:[%s598 + $0x8] sm:$0xff]
    %v601 = vld [vmem:[%s598 + $0x10] sm:$0xff]
    %v602 = vld [vmem:[%s598 + $0x18] sm:$0xff]
    %v603 = vld [vmem:[%s598 + $0x20] sm:$0xff]
    %v604 = vld [vmem:[%s598 + $0x28] sm:$0xff]
    %v605 = vld [vmem:[%s598 + $0x30] sm:$0xff]
    %v606 = vld [vmem:[%s598 + $0x38] sm:$0xff]
    %v607 = vld [vmem:[%s598 + $0x40] sm:$0xff]
    %v608 = vld [vmem:[%s598 + $0x48] sm:$0xff]
    %v609 = vld [vmem:[%s598 + $0x50] sm:$0xff]
    %v610 = vld [vmem:[%s598 + $0x58] sm:$0xff]
    %v611 = vld [vmem:[%s598 + $0x60] sm:$0xff]
    %v612 = vld [vmem:[%s598 + $0x68] sm:$0xff]
    %v613 = vld [vmem:[%s598 + $0x70] sm:$0xff]
    %v614 = vld [vmem:[%s598 + $0x78] sm:$0xff]
    %v615 = vld [vmem:[%s2 + $0x2] sm:$0x1]
    %616 = vmatprep.subr.mxu0 0.0
    %617 = vmatpush1.xpose.msra.mxu0 %v599
    %618 = vmatprep.subr.mxu0 0.0
    %619 = vmatpush1.xpose.msra.mxu0 %v600
    %620 = vmatprep.subr.mxu0 0.0
    %621 = vmatpush1.xpose.msra.mxu0 %v601
    %622 = vmatprep.subr.mxu0 0.0
    %623 = vmatpush1.xpose.msra.mxu0 %v602
    %624 = vmatprep.subr.mxu0 0.0
    %625 = vmatpush1.xpose.msra.mxu0 %v603
    %626 = vmatprep.subr.mxu0 0.0
    %627 = vmatpush1.xpose.msra.mxu0 %v604
    %628 = vmatprep.subr.mxu0 0.0
    %629 = vmatpush1.xpose.msra.mxu0 %v605
    %630 = vmatprep.subr.mxu0 0.0
    %631 = vmatpush1.xpose.msra.mxu0 %v606
    %632 = vmatprep.subr.mxu0 0.0
    %633 = vmatpush1.xpose.msra.mxu0 %v607
    %634 = vmatprep.subr.mxu0 0.0
    %635 = vmatpush1.xpose.msra.mxu0 %v608
    %636 = vmatprep.subr.mxu0 0.0
    %637 = vmatpush1.xpose.msra.mxu0 %v609
    %638 = vmatprep.subr.mxu0 0.0
    %639 = vmatpush1.xpose.msra.mxu0 %v610
    %640 = vmatprep.subr.mxu0 0.0
    %641 = vmatpush1.xpose.msra.mxu0 %v611
    %642 = vmatprep.subr.mxu0 0.0
    %643 = vmatpush1.xpose.msra.mxu0 %v612
    %644 = vmatprep.subr.mxu0 0.0
    %645 = vmatpush1.xpose.msra.mxu0 %v613
    %646 = vmatprep.subr.mxu0 0.0
    %647 = vmatpush1.xpose.msra.mxu0 %v614
    %648 = vmatprep.subr.mxu0 0.0
    %649 = vmatpush1.xpose.msra.mxu0 0.0
    %650 = vmatprep.subr.mxu0 0.0
    %651 = vmatpush1.xpose.msra.mxu0 0.0
    %652 = vmatprep.subr.mxu0 0.0
    %653 = vmatpush1.xpose.msra.mxu0 0.0
    %654 = vmatprep.subr.mxu0 0.0
    %655 = vmatpush1.xpose.msra.mxu0 0.0
    %656 = vmatprep.subr.mxu0 0.0
    %657 = vmatpush1.xpose.msra.mxu0 0.0
    %658 = vmatprep.subr.mxu0 0.0
    %659 = vmatpush1.xpose.msra.mxu0 0.0
    %660 = vmatprep.subr.mxu0 0.0
    %661 = vmatpush1.xpose.msra.mxu0 0.0
    %662 = vmatprep.subr.mxu0 0.0
    %663 = vmatpush1.xpose.msra.mxu0 0.0
    %664 = vmatprep.subr.mxu0 0.0
    %665 = vmatpush1.xpose.msra.mxu0 0.0
    %666 = vmatprep.subr.mxu0 0.0
    %667 = vmatpush1.xpose.msra.mxu0 0.0
    %668 = vmatprep.subr.mxu0 0.0
    %669 = vmatpush1.xpose.msra.mxu0 0.0
    %670 = vmatprep.subr.mxu0 0.0
    %671 = vmatpush1.xpose.msra.mxu0 0.0
    %672 = vmatprep.subr.mxu0 0.0
    %673 = vmatpush1.xpose.msra.mxu0 0.0
    %674 = vmatprep.subr.mxu0 0.0
    %675 = vmatpush1.xpose.msra.mxu0 0.0
    %676 = vmatprep.subr.mxu0 0.0
    %677 = vmatpush1.xpose.msra.mxu0 0.0
    %678 = vmatprep.subr.mxu0 0.0
    %679 = vmatpush1.xpose.msra.mxu0 0.0
    %680 = vmatprep.mubr.f32.mxu0 0.0
    %681 = vmatmul.mubr.f32.gmra.mrb[0].mxu0 %v594
    %v682 = vpop.f32.mrb[0].mxu0
    %v683 = vadd.f32 0.0, %v682
    %v684 = vpop.f32.mrb[0].mxu0
    %685 = vmatprep.mubr.f32.mxu0 0.0
    %686 = vmatmul.mubr.f32.gmra.mrb[0].mxu0 %v595
    %v687 = vpop.f32.mrb[0].mxu0
    %v688 = vadd.f32 0.0, %v687
    %v689 = vpop.f32.mrb[0].mxu0
    %690 = vdwg.mxu0
    %v691 = vmul.f32 %v683, 2.0
    %v692 = vmul.f32 %v688, 2.0
    %v693 = vlaneseq
    %v694 = vshrl.u32 %v693, 7
    %v695 = vsub.s32 0, %v694
    %v696 = vrot.slane %v615, %v695
    %v697 = vsub.f32 %v696, %v691
    %v698 = vsub.f32 %v696, %v692
    %699 = vmin.xlane.f32.xlu0 %v697
    %v700 = vpop.xlane.xlu0 %699
    %701 = vmin.xlane.f32.xlu0 %v698
    %v702 = vpop.xlane.xlu0 %701
    %vm703 = vcmp.eq.f32.partialorder %v697, %v700
    %vm704 = vcmp.eq.f32.partialorder %v698, %v702
    %v705 = vsel %vm703, %v52, 128
    %v706 = vsel %vm704, %v52, 128
    %v707 = vand.u32 %v705, 65535
    %v708 = vshra.s32 %v705, 16
    %v709 = vcvt.s32.f32 %v707
    %v710 = vcvt.s32.f32 %v708
    %711 = vmin.xlane.f32.xlu0 %v710
    %v712 = vpop.xlane.xlu0 %711
    %vm713 = vcmp.eq.f32.partialorder %v710, %v712
    %v714 = vsel %vm713, %v709, inf
    %715 = vmin.xlane.f32.xlu0 %v714
    %v716 = vpop.xlane.xlu0 %715
    %v717 = vcvt.f32.s32 %v716
    %v718 = vcvt.f32.s32 %v712
    %v719 = vshll.u32 %v718, 16
    %v720 = vadd.s32 %v719, %v717
    %v721 = vand.u32 %v706, 65535
    %v722 = vshra.s32 %v706, 16
    %v723 = vcvt.s32.f32 %v721
    %v724 = vcvt.s32.f32 %v722
    %725 = vmin.xlane.f32.xlu0 %v724
    %v726 = vpop.xlane.xlu0 %725
    %vm727 = vcmp.eq.f32.partialorder %v724, %v726
    %v728 = vsel %vm727, %v723, inf
    %729 = vmin.xlane.f32.xlu0 %v728
    %v730 = vpop.xlane.xlu0 %729
    %v731 = vcvt.f32.s32 %v730
    %v732 = vcvt.f32.s32 %v726
    %v733 = vshll.u32 %v732, 16
    %v734 = vadd.s32 %v733, %v731
    %v735 = vsub.f32 %v700, %v697
    %v736 = vsub.f32 %v702, %v698
    %v737 = vmul.f32 %v735, 1.442695
    %v738 = vpow.pop %v737
    %v739 = vmul.f32 %v736, 1.442695
    %v740 = vpow.pop %v739
    %741 = vadd.xlane.f32.xlu0 %v738
    %v742 = vpop.xlane.xlu0 %741
    %743 = vadd.xlane.f32.xlu0 %v740
    %v744 = vpop.xlane.xlu0 %743
    %v745 = vrcp.pop %v742
    %v746 = vrcp.pop %v744
    %v747 = vmul.f32 %v738, %v745
    %v748 = vmul.f32 %v740, %v746
    %vm749 = vcmp.eq.s32.totalorder %v52, %v720
    %vm750 = vcmp.eq.s32.totalorder %v52, %v734
    %v751 = vsel %vm749, 1, 0
    %v752 = vsel %vm750, 1, 0
    %v753 = vcvt.s32.f32 %v751
    %v754 = vcvt.s32.f32 %v752
    %755 = vmatprep.subr.mxu0 0.0
    %756 = vmatpush1.msra.mxu0 %v599
    %757 = vmatprep.subr.mxu0 0.0
    %758 = vmatpush1.msra.mxu0 %v600
    %759 = vmatprep.subr.mxu0 0.0
    %760 = vmatpush1.msra.mxu0 %v601
    %761 = vmatprep.subr.mxu0 0.0
    %762 = vmatpush1.msra.mxu0 %v602
    %763 = vmatprep.subr.mxu0 0.0
    %764 = vmatpush1.msra.mxu0 %v603
    %765 = vmatprep.subr.mxu0 0.0
    %766 = vmatpush1.msra.mxu0 %v604
    %767 = vmatprep.subr.mxu0 0.0
    %768 = vmatpush1.msra.mxu0 %v605
    %769 = vmatprep.subr.mxu0 0.0
    %770 = vmatpush1.msra.mxu0 %v606
    %771 = vmatprep.subr.mxu0 0.0
    %772 = vmatpush1.msra.mxu0 %v607
    %773 = vmatprep.subr.mxu0 0.0
    %774 = vmatpush1.msra.mxu0 %v608
    %775 = vmatprep.subr.mxu0 0.0
    %776 = vmatpush1.msra.mxu0 %v609
    %777 = vmatprep.subr.mxu0 0.0
    %778 = vmatpush1.msra.mxu0 %v610
    %779 = vmatprep.subr.mxu0 0.0
    %780 = vmatpush1.msra.mxu0 %v611
    %781 = vmatprep.subr.mxu0 0.0
    %782 = vmatpush1.msra.mxu0 %v612
    %783 = vmatprep.subr.mxu0 0.0
    %784 = vmatpush1.msra.mxu0 %v613
    %785 = vmatprep.subr.mxu0 0.0
    %786 = vmatpush1.msra.mxu0 %v614
    %787 = vmatprep.subr.mxu0 0.0
    %788 = vmatpush1.msra.mxu0 0.0
    %789 = vmatprep.subr.mxu0 0.0
    %790 = vmatpush1.msra.mxu0 0.0
    %791 = vmatprep.subr.mxu0 0.0
    %792 = vmatpush1.msra.mxu0 0.0
    %793 = vmatprep.subr.mxu0 0.0
    %794 = vmatpush1.msra.mxu0 0.0
    %795 = vmatprep.subr.mxu0 0.0
    %796 = vmatpush1.msra.mxu0 0.0
    %797 = vmatprep.subr.mxu0 0.0
    %798 = vmatpush1.msra.mxu0 0.0
    %799 = vmatprep.subr.mxu0 0.0
    %800 = vmatpush1.msra.mxu0 0.0
    %801 = vmatprep.subr.mxu0 0.0
    %802 = vmatpush1.msra.mxu0 0.0
    %803 = vmatprep.subr.mxu0 0.0
    %804 = vmatpush1.msra.mxu0 0.0
    %805 = vmatprep.subr.mxu0 0.0
    %806 = vmatpush1.msra.mxu0 0.0
    %807 = vmatprep.subr.mxu0 0.0
    %808 = vmatpush1.msra.mxu0 0.0
    %809 = vmatprep.subr.mxu0 0.0
    %810 = vmatpush1.msra.mxu0 0.0
    %811 = vmatprep.subr.mxu0 0.0
    %812 = vmatpush1.msra.mxu0 0.0
    %813 = vmatprep.subr.mxu0 0.0
    %814 = vmatpush1.msra.mxu0 0.0
    %815 = vmatprep.subr.mxu0 0.0
    %816 = vmatpush1.msra.mxu0 0.0
    %817 = vmatprep.subr.mxu0 0.0
    %818 = vmatpush1.msra.mxu0 0.0
    %819 = vmatprep.mubr.f32.mxu0 0.0
    %820 = vmatmul.mubr.f32.gmra.mrb[0].mxu0 %v753
    %v821 = vpop.f32.mrb[0].mxu0
    %v822 = vadd.f32 0.0, %v821
    %v823 = vpop.f32.mrb[0].mxu0
    %824 = vmatprep.mubr.f32.mxu0 0.0
    %825 = vmatmul.mubr.f32.gmra.mrb[0].mxu0 %v754
    %v826 = vpop.f32.mrb[0].mxu0
    %v827 = vadd.f32 0.0, %v826
    %v828 = vpop.f32.mrb[0].mxu0
    %829 = vdwg.mxu0
    %v830 = vmul.f32 %v594, %v594
    %v831 = vmul.f32 %v595, %v595
    %832 = vadd.xlane.f32.xlu0 %v830
    %v833 = vpop.xlane.xlu0 %832
    %834 = vadd.xlane.f32.xlu0 %v831
    %v835 = vpop.xlane.xlu0 %834
    %v836 = vadd.f32 %v700, %v833
    %v837 = vadd.f32 %v702, %v835
    %v838 = vmul.f32 %v836, 0.0315625
    %v839 = vmul.f32 %v837, 0.0315625
    %v840 = vlaneseq
    %v841 = vshrl.u32 %v840, 7
    %v842 = vsub.s32 %v52, %v841
    %v843 = vrot.slane %v720, %v842
    %v844 = vlaneseq
    %v845 = vshrl.u32 %v844, 7
    %v846 = vsub.s32 %v298, %v845
    %v847 = vrot.slane %v734, %v846
    %v848 = vsel %vm303, %v847, %v843
    %849 = vst.msk [vmem:[#allocation7 + $0x2] sm:$0x1] %vm305, %v848
    %s850 = scalar_lea.vmem [#allocation8], 32
    %851 = vst [vmem:[%s850] sm:$0xff] %v747
    %852 = vst [vmem:[%s850 + $0x8] sm:$0xff] %v748
    %v855 = vlaneseq
    %v856 = vshrl.u32 %v855, 7
    %v857 = vsub.s32 %v52, %v856
    %v858 = vrot.slane %v838, %v857
    %v859 = vlaneseq
    %v860 = vshrl.u32 %v859, 7
    %v861 = vsub.s32 %v298, %v860
    %v862 = vrot.slane %v839, %v861
    %v863 = vsel %vm303, %v862, %v858
    %865 = vst.msk [vmem:[#allocation11 + $0x2] sm:$0x1] %vm305, %v863
    %v866 = vadd.f32 %v596, %v822
    %v867 = vadd.f32 %v597, %v827
    %868 = vst [vmem:[#allocation10] sm:$0xff] %v866
    %869 = vst [vmem:[#allocation10 + $0x8] sm:$0xff] %v867
    // Predicated region
    $region22: #{tpu_custom_call.1} parent=1 // pred_check
      _
    $region23: #{tpu_custom_call.1} parent=1 // pred_check_branch
      %871 = sbr.rel (0) target = $region25
    $region24: #{tpu_custom_call.1} parent=1 // pred_region
      %s873 = ssub.s32 64, 64
      %874 = vsyncadd [#allocation4], %s873
      %s876 = sshll.u32 [#allocation7], 4
      %s877 = int_to_ptr.vmem [resolvable:$true] %s876
      %879 = dma.vmem_to_hbm [thread:$0]  %s877, 64, %s3, [#allocation4]
    $region25: #{tpu_custom_call.1} parent=1 // pred_fallthru
      _
    // Predicated region
    $region26: #{tpu_custom_call.1} parent=1 // pred_check
      _
    $region27: #{tpu_custom_call.1} parent=1 // pred_check_branch
      %881 = sbr.rel (0) target = $region29
    $region28: #{tpu_custom_call.1} parent=1 // pred_region
      %s883 = ssub.s32 768, 768
      %884 = vsyncadd [#allocation9], %s883
      %s885 = sshll.u32 [#allocation8], 4
      %s886 = int_to_ptr.vmem [resolvable:$true] %s885
      %891 = dma.vmem_to_hbm [thread:$0]  %s886, 768, %s4, [#allocation9], 128, 128, 8
    $region29: #{tpu_custom_call.1} parent=1 // pred_fallthru
      _
    // Predicated region
    $region30: #{tpu_custom_call.1} parent=1 // pred_check
      _
    $region31: #{tpu_custom_call.1} parent=1 // pred_check_branch
      %893 = sbr.rel (0) target = $region33
    $region32: #{tpu_custom_call.1} parent=1 // pred_region
      %s895 = ssub.s32 256, 256
      %896 = vsyncadd [#allocation9], %s895
      %s897 = sshll.u32 [#allocation10], 4
      %s898 = int_to_ptr.vmem [resolvable:$true] %s897
      %903 = dma.vmem_to_hbm [thread:$0]  %s898, 256, %s5, [#allocation9], 128, 128, 8
    $region33: #{tpu_custom_call.1} parent=1 // pred_fallthru
      _
    // Predicated region
    $region34: #{tpu_custom_call.1} parent=1 // pred_check
      _
    $region35: #{tpu_custom_call.1} parent=1 // pred_check_branch
      %905 = sbr.rel (0) target = $region37
    $region36: #{tpu_custom_call.1} parent=1 // pred_region
      %s907 = ssub.s32 64, 64
      %908 = vsyncadd [#allocation12], %s907
      %s910 = sshll.u32 [#allocation11], 4
      %s911 = int_to_ptr.vmem [resolvable:$true] %s910
      %913 = dma.vmem_to_hbm [thread:$0]  %s911, 64, %s6, [#allocation12]
    $region37: #{tpu_custom_call.1} parent=1 // pred_fallthru
      _
    // Predicated region
    $region38: #{tpu_custom_call.1} parent=1 // pred_check
      _
    $region39: #{tpu_custom_call.1} parent=1 // pred_check_branch
      %915 = sbr.rel (0) target = $region41
    $region40: #{tpu_custom_call.1} parent=1 // pred_region
      %916 = dma.done [#allocation4], 64
    $region41: #{tpu_custom_call.1} parent=1 // pred_fallthru
      _
    // Predicated region
    $region42: #{tpu_custom_call.1} parent=1 // pred_check
      _
    $region43: #{tpu_custom_call.1} parent=1 // pred_check_branch
      %918 = sbr.rel (0) target = $region45
    $region44: #{tpu_custom_call.1} parent=1 // pred_region
      %919 = dma.done [#allocation9], 768
    $region45: #{tpu_custom_call.1} parent=1 // pred_fallthru
      _
    // Predicated region
    $region46: #{tpu_custom_call.1} parent=1 // pred_check
      _
    $region47: #{tpu_custom_call.1} parent=1 // pred_check_branch
      %921 = sbr.rel (0) target = $region49
    $region48: #{tpu_custom_call.1} parent=1 // pred_region
      %922 = dma.done [#allocation9], 256
    $region49: #{tpu_custom_call.1} parent=1 // pred_fallthru
      _
    // Predicated region
    $region50: #{tpu_custom_call.1} parent=1 // pred_check
      _
    $region51: #{tpu_custom_call.1} parent=1 // pred_check_branch
      %924 = sbr.rel (0) target = $region53
    $region52: #{tpu_custom_call.1} parent=1 // pred_region
      %925 = dma.done [#allocation12], 64
    $region53: #{tpu_custom_call.1} parent=1 // pred_fallthru
      _
    %926 = vsyncpa [#allocation3], 1
    %927 = vsyncpa [#allocation6], 1
    %928 = vsyncpa [#allocation4], 1
    %929 = vsyncpa [#allocation9], 1
    %930 = vsyncpa [#allocation12], 1

</llo_original>
